<compile_context>
chip_gen: v5e
topology: v5e:2x2
jax: 0.10.0
libtpu: 0.0.40
codegen_flags: <defaults>
</compile_context>

<pallas_src>
import jax
import jax.numpy as jnp
from jax.experimental import pallas as pl
from jax.experimental.pallas import tpu as pltpu

INPUT_DIM = 256
NUM_CLASSES = 4          # ['dung', 'huy', 'khoa', 'thuong']
NUM_HEADS = 2
HIDDEN = 64
FF_DIM = 2048            # PyTorch TransformerEncoderLayer default
FF_CHUNK = 512           # K-chunk of the 2048 feed-forward dim
HEAD_DIM = HIDDEN // NUM_HEADS
EPS = 1e-5               # PyTorch layer_norm_eps default


def _layernorm(x, gamma, beta):
    mu = jnp.mean(x, axis=-1, keepdims=True)
    var = jnp.mean((x - mu) ** 2, axis=-1, keepdims=True)
    return (x - mu) * jax.lax.rsqrt(var + EPS) * gamma + beta


def transformer_kernel(x_ref,            # (BB, 256, T) f32  -- NCT layout, this step's batch slab
                       w_emb_ref,        # (256, 64)    bf16
                       w_qkv_ref,        # (64, 192)    bf16  columns [q | k | v], q pre-scaled
                       w_out_ref,        # (64, 64)     bf16
                       w1_ref,           # (64, 2048)   bf16
                       w2_ref,           # (2048, 64)   bf16
                       bias64_ref,       # (7, 64)  f32 rows: b_emb,b_out,g1,be1,b2,g2,be2
                       b_qkv_ref,        # (1, 192) f32  q part pre-scaled
                       b1_ref,           # (1, 2048) f32
                       out_ref):         # (BB, 1, 64) f32  -- mean-pooled features
    BB, C, T = x_ref.shape
    M = BB * T

    b_emb = bias64_ref[0:1, :]
    b_out = bias64_ref[1:2, :]
    g1 = bias64_ref[2:3, :]
    be1 = bias64_ref[3:4, :]
    b2 = bias64_ref[4:5, :]
    g2 = bias64_ref[5:6, :]
    be2 = bias64_ref[6:7, :]

    # --- NCT -> NTC fold: exact per-element transpose via identity matmul ---
    # xt[b, t, c] = x[b, c, t]; NT-form batched dot (same shape pattern as
    # flash-attention scores), f32 so the permutation is bit-exact.
    xb = x_ref[...]                                                   # (BB, 256, T) f32
    row = jax.lax.broadcasted_iota(jnp.int32, (T, T), 0)
    col = jax.lax.broadcasted_iota(jnp.int32, (T, T), 1)
    eye = (row == col).astype(jnp.float32)                            # (T, T)
    eye_b = jnp.broadcast_to(eye, (BB, T, T))
    xt = jnp.einsum('bij,bcj->bic', eye_b, xb,
                    preferred_element_type=jnp.float32)               # (BB, T, 256)
    x2d = xt.reshape(M, C).astype(jnp.bfloat16)                       # (M, 256) bf16

    # --- embedding: Linear(256 -> 64) ---
    emb = jnp.dot(x2d, w_emb_ref[...],
                  preferred_element_type=jnp.float32) + b_emb         # (M, 64) f32
    emb_bf = emb.astype(jnp.bfloat16)

    # --- multi-head self-attention (post-norm encoder layer) ---
    # Fused QKV projection: one (M,64)@(64,192) matmul, per-head lane slices.
    # TODO(synk): dropout (p=0.3) is train-mode only; eval identity used here.
    qkv = jnp.dot(emb_bf, w_qkv_ref[...],
                  preferred_element_type=jnp.float32) + b_qkv_ref[...]  # (M, 192) f32

    ctx_heads = []
    for h in range(NUM_HEADS):                                        # 2 unrolled iterations
        qs = slice(h * HEAD_DIM, (h + 1) * HEAD_DIM)
        ks = slice(HIDDEN + h * HEAD_DIM, HIDDEN + (h + 1) * HEAD_DIM)
        vs = slice(2 * HIDDEN + h * HEAD_DIM, 2 * HIDDEN + (h + 1) * HEAD_DIM)
        q = qkv[:, qs].reshape(BB, T, HEAD_DIM).astype(jnp.bfloat16)
        k = qkv[:, ks].reshape(BB, T, HEAD_DIM).astype(jnp.bfloat16)
        v = qkv[:, vs].reshape(BB, T, HEAD_DIM).astype(jnp.bfloat16)
        # attention is block-diagonal over the batch -> batched einsums
        s = jnp.einsum('bqd,bkd->bqk', q, k,
                       preferred_element_type=jnp.float32)            # (BB, T, T)
        m = jnp.max(s, axis=-1, keepdims=True)
        e = jnp.exp(s - m)
        p = e * pl.reciprocal(jnp.sum(e, axis=-1, keepdims=True), approx=True)
        ctx = jnp.einsum('bqk,bkd->bqd', p.astype(jnp.bfloat16), v,
                         preferred_element_type=jnp.float32)          # (BB, T, 32)
        ctx_heads.append(ctx.reshape(M, HEAD_DIM))
    ctx_all = jnp.concatenate(ctx_heads, axis=-1).astype(jnp.bfloat16)  # (M, 64)

    attn = jnp.dot(ctx_all, w_out_ref[...],
                   preferred_element_type=jnp.float32) + b_out        # (M, 64) f32

    # residual + layernorm1 (f32)
    x1 = _layernorm(emb + attn, g1, be1)
    x1_bf = x1.astype(jnp.bfloat16)

    # --- feed-forward: relu(x @ W1 + b1) @ W2 + b2, K-chunked over 2048 ---
    h2 = jnp.zeros((M, HIDDEN), jnp.float32)
    for c in range(0, FF_DIM, FF_CHUNK):                              # 4 unrolled chunks
        h1c = jnp.dot(x1_bf, w1_ref[:, c:c + FF_CHUNK],
                      preferred_element_type=jnp.float32) + b1_ref[:, c:c + FF_CHUNK]
        h1c = jnp.maximum(h1c, 0.0).astype(jnp.bfloat16)              # (M, 512)
        h2 = h2 + jnp.dot(h1c, w2_ref[c:c + FF_CHUNK, :],
                          preferred_element_type=jnp.float32)
    h2 = h2 + b2

    # residual + layernorm2 (f32)
    x2 = _layernorm(x1 + h2, g2, be2)                                 # (M, 64)

    # --- mean pool over T per batch element (pooling-matrix matmul) ---
    b_of_row = jax.lax.broadcasted_iota(jnp.int32, (BB, M), 0)
    r_of_col = jax.lax.broadcasted_iota(jnp.int32, (BB, M), 1)
    in_group = (r_of_col >= b_of_row * T) & (r_of_col < (b_of_row + 1) * T)
    pool = jnp.where(in_group, 1.0 / T, 0.0).astype(jnp.float32)      # (BB, M)
    pooled = jnp.dot(pool, x2, preferred_element_type=jnp.float32)    # (BB, 64)
    out_ref[...] = pooled.reshape(BB, 1, HIDDEN)


def init_params(key):
    """Logical parameters matching the PyTorch module (weights pre-transposed to (in, out))."""
    ks = jax.random.split(key, 12)

    def n(k, shape, scale=0.02):
        return scale * jax.random.normal(k, shape, dtype=jnp.float32)

    return dict(
        w_emb=n(ks[0], (INPUT_DIM, HIDDEN)),
        b_emb=n(ks[1], (HIDDEN,)),
        w_in=n(ks[2], (HIDDEN, 3 * HIDDEN)),     # in_proj^T, columns = [q | k | v]
        b_in=n(ks[3], (3 * HIDDEN,)),
        w_out=n(ks[4], (HIDDEN, HIDDEN)),        # out_proj^T
        b_out=n(ks[5], (HIDDEN,)),
        g1=jnp.ones((HIDDEN,), jnp.float32),
        be1=jnp.zeros((HIDDEN,), jnp.float32),
        w1=n(ks[6], (HIDDEN, FF_DIM)),
        b1=n(ks[7], (FF_DIM,)),
        w2=n(ks[8], (FF_DIM, HIDDEN)),
        b2=n(ks[9], (HIDDEN,)),
        g2=jnp.ones((HIDDEN,), jnp.float32),
        be2=jnp.zeros((HIDDEN,), jnp.float32),
        w_fc=n(ks[10], (HIDDEN, NUM_CLASSES)),
        b_fc=n(ks[11], (NUM_CLASSES,)),
    )


def pack_params(p):
    """One-time repack: fused QKV, q-scale folding, bf16 matmul weights, f32 bias slabs."""
    scale = 1.0 / (HEAD_DIM ** 0.5)
    w_qkv = p["w_in"].at[:, 0:HIDDEN].multiply(scale)       # fold 1/sqrt(head_dim) into q cols
    b_qkv = p["b_in"].at[0:HIDDEN].multiply(scale)
    bias64 = jnp.stack([p["b_emb"], p["b_out"], p["g1"], p["be1"],
                        p["b2"], p["g2"], p["be2"]], axis=0)          # (7, 64)
    return dict(
        w_emb=p["w_emb"].astype(jnp.bfloat16),
        w_qkv=w_qkv.astype(jnp.bfloat16),
        w_out=p["w_out"].astype(jnp.bfloat16),
        w1=p["w1"].astype(jnp.bfloat16),
        w2=p["w2"].astype(jnp.bfloat16),
        bias64=bias64.astype(jnp.float32),
        b_qkv=b_qkv.reshape(1, 3 * HIDDEN).astype(jnp.float32),
        b1=p["b1"].reshape(1, FF_DIM).astype(jnp.float32),
        w_fc=p["w_fc"].astype(jnp.float32),
        b_fc=p["b_fc"].reshape(1, NUM_CLASSES).astype(jnp.float32),
    )


def transformer_speaker_id(x_nct, kp, *, target_rows=256):
    """x_nct: (B, input_dim, T) float32 -- same layout the PyTorch module receives."""
    B, C, T = x_nct.shape
    assert C == INPUT_DIM
    x = x_nct.astype(jnp.float32)

    # BB elements per grid step so matmuls run with M = BB*T rows, but keep the
    # grid at >= 2 steps (v7x has 2 TensorCores; "parallel" axis shards them).
    bb = max(1, min(target_rows // max(T, 1), B))
    if B >= 2:
        bb = min(bb, pl.cdiv(B, 2))
    grid = (pl.cdiv(B, bb),)

    args = (x, kp["w_emb"], kp["w_qkv"], kp["w_out"], kp["w1"], kp["w2"],
            kp["bias64"], kp["b_qkv"], kp["b1"])

    def full_spec(a):
        # Whole-array VMEM block; constant block index -> DMA'd once.
        return pl.BlockSpec(a.shape, lambda i, n=a.ndim: (0,) * n)

    in_specs = [pl.BlockSpec((bb, INPUT_DIM, T), lambda i: (i, 0, 0))]
    in_specs += [full_spec(a) for a in args[1:]]

    pooled = pl.pallas_call(
        transformer_kernel,
        out_shape=jax.ShapeDtypeStruct((B, 1, HIDDEN), jnp.float32),
        grid=grid,
        in_specs=in_specs,
        out_specs=pl.BlockSpec((bb, 1, HIDDEN), lambda i: (i, 0, 0)),
        compiler_params=pltpu.CompilerParams(
            dimension_semantics=("parallel",),
            vmem_limit_bytes=32 << 20),
    )(*args)

    pooled = pooled.reshape(B, HIDDEN)
    # Tiny 64 x num_classes classifier left to XLA (keeps kernel stores lane-dense).
    return pooled @ kp["w_fc"] + kp["b_fc"]


if __name__ == "__main__":
    key = jax.random.PRNGKey(0)
    kx, kparam = jax.random.split(key)
    B, T = 2, 8
    x = jax.random.normal(kx, (B, INPUT_DIM, T), dtype=jnp.float32)
    params = pack_params(init_params(kparam))

    out = transformer_speaker_id(x, params)
    out = jax.block_until_ready(out)
    assert out.shape == (B, NUM_CLASSES), out.shape
    assert bool(jnp.all(jnp.isfinite(out)))
    print("KERNEL_OK")
</pallas_src>

<mosaic_0001>
module attributes {stable_mosaic.version = 11 : i64} {
  func.func @transformer_kernel(%arg0: i32, %arg1: memref<1x256x8xf32, #tpu.memory_space<vmem>>, %arg2: memref<256x64xbf16, #tpu.memory_space<vmem>>, %arg3: memref<64x192xbf16, #tpu.memory_space<vmem>>, %arg4: memref<64x64xbf16, #tpu.memory_space<vmem>>, %arg5: memref<64x2048xbf16, #tpu.memory_space<vmem>>, %arg6: memref<2048x64xbf16, #tpu.memory_space<vmem>>, %arg7: memref<7x64xf32, #tpu.memory_space<vmem>>, %arg8: memref<1x192xf32, #tpu.memory_space<vmem>>, %arg9: memref<1x2048xf32, #tpu.memory_space<vmem>>, %arg10: memref<1x1x64xf32, #tpu.memory_space<vmem>>) attributes {dimension_semantics = [#tpu.dimension_semantics<parallel>], iteration_bounds = array<i64: 2>, scalar_prefetch = 0 : i64, scratch_operands = 0 : i64, tpu.core_type = #tpu.core_type<tc>, window_params = [{transform_indices = @transform_0, window_bounds = array<i64: 1, 256, 8>}, {pipeline_mode = #tpu.pipeline_mode<synchronous>, transform_indices = @transform_1, window_bounds = array<i64: 256, 64>}, {pipeline_mode = #tpu.pipeline_mode<synchronous>, transform_indices = @transform_2, window_bounds = array<i64: 64, 192>}, {pipeline_mode = #tpu.pipeline_mode<synchronous>, transform_indices = @transform_3, window_bounds = array<i64: 64, 64>}, {pipeline_mode = #tpu.pipeline_mode<synchronous>, transform_indices = @transform_4, window_bounds = array<i64: 64, 2048>}, {pipeline_mode = #tpu.pipeline_mode<synchronous>, transform_indices = @transform_5, window_bounds = array<i64: 2048, 64>}, {pipeline_mode = #tpu.pipeline_mode<synchronous>, transform_indices = @transform_6, window_bounds = array<i64: 7, 64>}, {pipeline_mode = #tpu.pipeline_mode<synchronous>, transform_indices = @transform_7, window_bounds = array<i64: 1, 192>}, {pipeline_mode = #tpu.pipeline_mode<synchronous>, transform_indices = @transform_8, window_bounds = array<i64: 1, 2048>}, {transform_indices = @transform_9, window_bounds = array<i64: 1, 1, 64>}]} {
    %c0 = arith.constant 0 : index
    %c0_0 = arith.constant 0 : index
    %0 = vector.load %arg7[%c0, %c0_0] : memref<7x64xf32, #tpu.memory_space<vmem>>, vector<1x64xf32>
    %c1 = arith.constant 1 : index
    %c0_1 = arith.constant 0 : index
    %1 = vector.load %arg7[%c1, %c0_1] : memref<7x64xf32, #tpu.memory_space<vmem>>, vector<1x64xf32>
    %c2 = arith.constant 2 : index
    %c0_2 = arith.constant 0 : index
    %2 = vector.load %arg7[%c2, %c0_2] : memref<7x64xf32, #tpu.memory_space<vmem>>, vector<1x64xf32>
    %c3 = arith.constant 3 : index
    %c0_3 = arith.constant 0 : index
    %3 = vector.load %arg7[%c3, %c0_3] : memref<7x64xf32, #tpu.memory_space<vmem>>, vector<1x64xf32>
    %c4 = arith.constant 4 : index
    %c0_4 = arith.constant 0 : index
    %4 = vector.load %arg7[%c4, %c0_4] : memref<7x64xf32, #tpu.memory_space<vmem>>, vector<1x64xf32>
    %c5 = arith.constant 5 : index
    %c0_5 = arith.constant 0 : index
    %5 = vector.load %arg7[%c5, %c0_5] : memref<7x64xf32, #tpu.memory_space<vmem>>, vector<1x64xf32>
    %c6 = arith.constant 6 : index
    %c0_6 = arith.constant 0 : index
    %6 = vector.load %arg7[%c6, %c0_6] : memref<7x64xf32, #tpu.memory_space<vmem>>, vector<1x64xf32>
    %c0_7 = arith.constant 0 : index
    %c0_8 = arith.constant 0 : index
    %c0_9 = arith.constant 0 : index
    %7 = vector.load %arg1[%c0_7, %c0_8, %c0_9] : memref<1x256x8xf32, #tpu.memory_space<vmem>>, vector<1x256x8xf32>
    %8 = tpu.iota {dimensions = array<i32: 0>} : vector<8x8xi32>
    %9 = tpu.iota {dimensions = array<i32: 1>} : vector<8x8xi32>
    %10 = arith.cmpi eq, %8, %9 : vector<8x8xi32>
    %11 = arith.extui %10 : vector<8x8xi1> to vector<8x8xi32>
    %12 = arith.sitofp %11 : vector<8x8xi32> to vector<8x8xf32>
    %13 = vector.shape_cast %12 : vector<8x8xf32> to vector<1x8x8xf32>
    "tpu.trace_start"() <{level = 10 : i32, message = "bij,bcj->bic"}> : () -> ()
    %cst = arith.constant dense<0.000000e+00> : vector<1x8x256xf32>
    %14 = tpu.matmul %13, %7, %cst {dimension_numbers = #tpu.dot_dimension_numbers<[2], [2], [1], [1], [0, 0, 0, 1, 1, 1], [0], [0]>} : vector<1x8x8xf32>, vector<1x256x8xf32>, vector<1x8x256xf32> -> vector<1x8x256xf32>
    "tpu.trace_stop"() : () -> ()
    %15 = vector.shape_cast %14 : vector<1x8x256xf32> to vector<8x256xf32>
    %16 = arith.truncf %15 : vector<8x256xf32> to vector<8x256xbf16>
    %c0_10 = arith.constant 0 : index
    %c0_11 = arith.constant 0 : index
    %17 = vector.load %arg2[%c0_10, %c0_11] : memref<256x64xbf16, #tpu.memory_space<vmem>>, vector<256x64xbf16>
    %cst_12 = arith.constant dense<0.000000e+00> : vector<8x64xf32>
    %18 = tpu.matmul %16, %17, %cst_12 {dimension_numbers = #tpu.dot_dimension_numbers<[1], [0], [0], [1], [0, 0, 1, 1], [], []>} : vector<8x256xbf16>, vector<256x64xbf16>, vector<8x64xf32> -> vector<8x64xf32>
    %19 = vector.broadcast %0 : vector<1x64xf32> to vector<8x64xf32>
    %20 = arith.addf %18, %19 : vector<8x64xf32>
    %21 = arith.truncf %20 : vector<8x64xf32> to vector<8x64xbf16>
    %c0_13 = arith.constant 0 : index
    %c0_14 = arith.constant 0 : index
    %22 = vector.load %arg3[%c0_13, %c0_14] : memref<64x192xbf16, #tpu.memory_space<vmem>>, vector<64x192xbf16>
    %cst_15 = arith.constant dense<0.000000e+00> : vector<8x192xf32>
    %23 = tpu.matmul %21, %22, %cst_15 {dimension_numbers = #tpu.dot_dimension_numbers<[1], [0], [0], [1], [0, 0, 1, 1], [], []>} : vector<8x64xbf16>, vector<64x192xbf16>, vector<8x192xf32> -> vector<8x192xf32>
    %c0_16 = arith.constant 0 : index
    %c0_17 = arith.constant 0 : index
    %24 = vector.load %arg8[%c0_16, %c0_17] : memref<1x192xf32, #tpu.memory_space<vmem>>, vector<1x192xf32>
    %25 = vector.broadcast %24 : vector<1x192xf32> to vector<8x192xf32>
    %26 = arith.addf %23, %25 : vector<8x192xf32>
    %27 = vector.extract_strided_slice %26 {offsets = [0, 0], sizes = [8, 32], strides = [1, 1]} : vector<8x192xf32> to vector<8x32xf32>
    %28 = vector.shape_cast %27 : vector<8x32xf32> to vector<1x8x32xf32>
    %29 = arith.truncf %28 : vector<1x8x32xf32> to vector<1x8x32xbf16>
    %30 = vector.extract_strided_slice %26 {offsets = [0, 64], sizes = [8, 32], strides = [1, 1]} : vector<8x192xf32> to vector<8x32xf32>
    %31 = vector.shape_cast %30 : vector<8x32xf32> to vector<1x8x32xf32>
    %32 = arith.truncf %31 : vector<1x8x32xf32> to vector<1x8x32xbf16>
    %33 = vector.extract_strided_slice %26 {offsets = [0, 128], sizes = [8, 32], strides = [1, 1]} : vector<8x192xf32> to vector<8x32xf32>
    %34 = vector.shape_cast %33 : vector<8x32xf32> to vector<1x8x32xf32>
    %35 = arith.truncf %34 : vector<1x8x32xf32> to vector<1x8x32xbf16>
    "tpu.trace_start"() <{level = 10 : i32, message = "bqd,bkd->bqk"}> : () -> ()
    %cst_18 = arith.constant dense<0.000000e+00> : vector<1x8x8xf32>
    %36 = tpu.matmul %29, %32, %cst_18 {dimension_numbers = #tpu.dot_dimension_numbers<[2], [2], [1], [1], [0, 0, 0, 1, 1, 1], [0], [0]>} : vector<1x8x32xbf16>, vector<1x8x32xbf16>, vector<1x8x8xf32> -> vector<1x8x8xf32>
    "tpu.trace_stop"() : () -> ()
    %cst_19 = arith.constant dense<0xFF800000> : vector<1x8xf32>
    %37 = vector.multi_reduction <maximumf>, %36, %cst_19 [2] : vector<1x8x8xf32> to vector<1x8xf32>
    %38 = vector.shape_cast %37 : vector<1x8xf32> to vector<1x8x1xf32>
    %39 = vector.broadcast %38 : vector<1x8x1xf32> to vector<1x8x8xf32>
    %40 = arith.subf %36, %39 : vector<1x8x8xf32>
    %41 = math.exp %40 : vector<1x8x8xf32>
    %cst_20 = arith.constant dense<0.000000e+00> : vector<1x8xf32>
    %42 = vector.multi_reduction <add>, %41, %cst_20 [2] : vector<1x8x8xf32> to vector<1x8xf32>
    %43 = vector.shape_cast %42 : vector<1x8xf32> to vector<1x8x1xf32>
    %44 = tpu.reciprocal %43 {approx = true} : vector<1x8x1xf32> -> vector<1x8x1xf32>
    %45 = vector.broadcast %44 : vector<1x8x1xf32> to vector<1x8x8xf32>
    %46 = arith.mulf %41, %45 : vector<1x8x8xf32>
    %47 = arith.truncf %46 : vector<1x8x8xf32> to vector<1x8x8xbf16>
    "tpu.trace_start"() <{level = 10 : i32, message = "bqk,bkd->bqd"}> : () -> ()
    %cst_21 = arith.constant dense<0.000000e+00> : vector<1x8x32xf32>
    %48 = tpu.matmul %47, %35, %cst_21 {dimension_numbers = #tpu.dot_dimension_numbers<[2], [1], [1], [2], [0, 0, 0, 1, 1, 2], [0], [0]>} : vector<1x8x8xbf16>, vector<1x8x32xbf16>, vector<1x8x32xf32> -> vector<1x8x32xf32>
    "tpu.trace_stop"() : () -> ()
    %49 = vector.shape_cast %48 : vector<1x8x32xf32> to vector<8x32xf32>
    %50 = vector.extract_strided_slice %26 {offsets = [0, 32], sizes = [8, 32], strides = [1, 1]} : vector<8x192xf32> to vector<8x32xf32>
    %51 = vector.shape_cast %50 : vector<8x32xf32> to vector<1x8x32xf32>
    %52 = arith.truncf %51 : vector<1x8x32xf32> to vector<1x8x32xbf16>
    %53 = vector.extract_strided_slice %26 {offsets = [0, 96], sizes = [8, 32], strides = [1, 1]} : vector<8x192xf32> to vector<8x32xf32>
    %54 = vector.shape_cast %53 : vector<8x32xf32> to vector<1x8x32xf32>
    %55 = arith.truncf %54 : vector<1x8x32xf32> to vector<1x8x32xbf16>
    %56 = vector.extract_strided_slice %26 {offsets = [0, 160], sizes = [8, 32], strides = [1, 1]} : vector<8x192xf32> to vector<8x32xf32>
    %57 = vector.shape_cast %56 : vector<8x32xf32> to vector<1x8x32xf32>
    %58 = arith.truncf %57 : vector<1x8x32xf32> to vector<1x8x32xbf16>
    "tpu.trace_start"() <{level = 10 : i32, message = "bqd,bkd->bqk"}> : () -> ()
    %cst_22 = arith.constant dense<0.000000e+00> : vector<1x8x8xf32>
    %59 = tpu.matmul %52, %55, %cst_22 {dimension_numbers = #tpu.dot_dimension_numbers<[2], [2], [1], [1], [0, 0, 0, 1, 1, 1], [0], [0]>} : vector<1x8x32xbf16>, vector<1x8x32xbf16>, vector<1x8x8xf32> -> vector<1x8x8xf32>
    "tpu.trace_stop"() : () -> ()
    %cst_23 = arith.constant dense<0xFF800000> : vector<1x8xf32>
    %60 = vector.multi_reduction <maximumf>, %59, %cst_23 [2] : vector<1x8x8xf32> to vector<1x8xf32>
    %61 = vector.shape_cast %60 : vector<1x8xf32> to vector<1x8x1xf32>
    %62 = vector.broadcast %61 : vector<1x8x1xf32> to vector<1x8x8xf32>
    %63 = arith.subf %59, %62 : vector<1x8x8xf32>
    %64 = math.exp %63 : vector<1x8x8xf32>
    %cst_24 = arith.constant dense<0.000000e+00> : vector<1x8xf32>
    %65 = vector.multi_reduction <add>, %64, %cst_24 [2] : vector<1x8x8xf32> to vector<1x8xf32>
    %66 = vector.shape_cast %65 : vector<1x8xf32> to vector<1x8x1xf32>
    %67 = tpu.reciprocal %66 {approx = true} : vector<1x8x1xf32> -> vector<1x8x1xf32>
    %68 = vector.broadcast %67 : vector<1x8x1xf32> to vector<1x8x8xf32>
    %69 = arith.mulf %64, %68 : vector<1x8x8xf32>
    %70 = arith.truncf %69 : vector<1x8x8xf32> to vector<1x8x8xbf16>
    "tpu.trace_start"() <{level = 10 : i32, message = "bqk,bkd->bqd"}> : () -> ()
    %cst_25 = arith.constant dense<0.000000e+00> : vector<1x8x32xf32>
    %71 = tpu.matmul %70, %58, %cst_25 {dimension_numbers = #tpu.dot_dimension_numbers<[2], [1], [1], [2], [0, 0, 0, 1, 1, 2], [0], [0]>} : vector<1x8x8xbf16>, vector<1x8x32xbf16>, vector<1x8x32xf32> -> vector<1x8x32xf32>
    "tpu.trace_stop"() : () -> ()
    %72 = vector.shape_cast %71 : vector<1x8x32xf32> to vector<8x32xf32>
    %73 = tpu.concatenate %49, %72 in 1 : vector<8x32xf32>, vector<8x32xf32> -> vector<8x64xf32>
    %74 = arith.truncf %73 : vector<8x64xf32> to vector<8x64xbf16>
    %c0_26 = arith.constant 0 : index
    %c0_27 = arith.constant 0 : index
    %75 = vector.load %arg4[%c0_26, %c0_27] : memref<64x64xbf16, #tpu.memory_space<vmem>>, vector<64x64xbf16>
    %cst_28 = arith.constant dense<0.000000e+00> : vector<8x64xf32>
    %76 = tpu.matmul %74, %75, %cst_28 {dimension_numbers = #tpu.dot_dimension_numbers<[1], [0], [0], [1], [0, 0, 1, 1], [], []>} : vector<8x64xbf16>, vector<64x64xbf16>, vector<8x64xf32> -> vector<8x64xf32>
    %77 = vector.broadcast %1 : vector<1x64xf32> to vector<8x64xf32>
    %78 = arith.addf %76, %77 : vector<8x64xf32>
    %79 = arith.addf %20, %78 : vector<8x64xf32>
    %cst_29 = arith.constant dense<0.000000e+00> : vector<8xf32>
    %80 = vector.multi_reduction <add>, %79, %cst_29 [1] : vector<8x64xf32> to vector<8xf32>
    %81 = vector.shape_cast %80 : vector<8xf32> to vector<8x1xf32>
    %cst_30 = arith.constant 6.400000e+01 : f32
    %82 = vector.broadcast %cst_30 : f32 to vector<8x1xf32>
    %83 = arith.divf %81, %82 : vector<8x1xf32>
    %84 = vector.broadcast %83 : vector<8x1xf32> to vector<8x64xf32>
    %85 = arith.subf %79, %84 : vector<8x64xf32>
    %86 = arith.mulf %85, %85 : vector<8x64xf32>
    %cst_31 = arith.constant dense<0.000000e+00> : vector<8xf32>
    %87 = vector.multi_reduction <add>, %86, %cst_31 [1] : vector<8x64xf32> to vector<8xf32>
    %88 = vector.shape_cast %87 : vector<8xf32> to vector<8x1xf32>
    %cst_32 = arith.constant 6.400000e+01 : f32
    %89 = vector.broadcast %cst_32 : f32 to vector<8x1xf32>
    %90 = arith.divf %88, %89 : vector<8x1xf32>
    %91 = vector.broadcast %83 : vector<8x1xf32> to vector<8x64xf32>
    %92 = arith.subf %79, %91 : vector<8x64xf32>
    %cst_33 = arith.constant 9.99999974E-6 : f32
    %93 = vector.broadcast %cst_33 : f32 to vector<8x1xf32>
    %94 = arith.addf %90, %93 : vector<8x1xf32>
    %95 = math.rsqrt %94 : vector<8x1xf32>
    %96 = vector.broadcast %95 : vector<8x1xf32> to vector<8x64xf32>
    %97 = arith.mulf %92, %96 : vector<8x64xf32>
    %98 = vector.broadcast %2 : vector<1x64xf32> to vector<8x64xf32>
    %99 = arith.mulf %97, %98 : vector<8x64xf32>
    %100 = vector.broadcast %3 : vector<1x64xf32> to vector<8x64xf32>
    %101 = arith.addf %99, %100 : vector<8x64xf32>
    %102 = arith.truncf %101 : vector<8x64xf32> to vector<8x64xbf16>
    %cst_34 = arith.constant 0.000000e+00 : f32
    %103 = vector.broadcast %cst_34 : f32 to vector<8x64xf32>
    %c0_35 = arith.constant 0 : index
    %c0_36 = arith.constant 0 : index
    %104 = vector.load %arg5[%c0_35, %c0_36] : memref<64x2048xbf16, #tpu.memory_space<vmem>>, vector<64x512xbf16>
    %cst_37 = arith.constant dense<0.000000e+00> : vector<8x512xf32>
    %105 = tpu.matmul %102, %104, %cst_37 {dimension_numbers = #tpu.dot_dimension_numbers<[1], [0], [0], [1], [0, 0, 1, 1], [], []>} : vector<8x64xbf16>, vector<64x512xbf16>, vector<8x512xf32> -> vector<8x512xf32>
    %c0_38 = arith.constant 0 : index
    %c0_39 = arith.constant 0 : index
    %106 = vector.load %arg9[%c0_38, %c0_39] : memref<1x2048xf32, #tpu.memory_space<vmem>>, vector<1x512xf32>
    %107 = vector.broadcast %106 : vector<1x512xf32> to vector<8x512xf32>
    %108 = arith.addf %105, %107 : vector<8x512xf32>
    %cst_40 = arith.constant 0.000000e+00 : f32
    %109 = vector.broadcast %cst_40 : f32 to vector<8x512xf32>
    %110 = arith.maximumf %108, %109 : vector<8x512xf32>
    %111 = arith.truncf %110 : vector<8x512xf32> to vector<8x512xbf16>
    %c0_41 = arith.constant 0 : index
    %c0_42 = arith.constant 0 : index
    %112 = vector.load %arg6[%c0_41, %c0_42] : memref<2048x64xbf16, #tpu.memory_space<vmem>>, vector<512x64xbf16>
    %cst_43 = arith.constant dense<0.000000e+00> : vector<8x64xf32>
    %113 = tpu.matmul %111, %112, %cst_43 {dimension_numbers = #tpu.dot_dimension_numbers<[1], [0], [0], [1], [0, 0, 1, 1], [], []>} : vector<8x512xbf16>, vector<512x64xbf16>, vector<8x64xf32> -> vector<8x64xf32>
    %114 = arith.addf %103, %113 : vector<8x64xf32>
    %c0_44 = arith.constant 0 : index
    %c512 = arith.constant 512 : index
    %115 = vector.load %arg5[%c0_44, %c512] : memref<64x2048xbf16, #tpu.memory_space<vmem>>, vector<64x512xbf16>
    %cst_45 = arith.constant dense<0.000000e+00> : vector<8x512xf32>
    %116 = tpu.matmul %102, %115, %cst_45 {dimension_numbers = #tpu.dot_dimension_numbers<[1], [0], [0], [1], [0, 0, 1, 1], [], []>} : vector<8x64xbf16>, vector<64x512xbf16>, vector<8x512xf32> -> vector<8x512xf32>
    %c0_46 = arith.constant 0 : index
    %c512_47 = arith.constant 512 : index
    %117 = vector.load %arg9[%c0_46, %c512_47] : memref<1x2048xf32, #tpu.memory_space<vmem>>, vector<1x512xf32>
    %118 = vector.broadcast %117 : vector<1x512xf32> to vector<8x512xf32>
    %119 = arith.addf %116, %118 : vector<8x512xf32>
    %cst_48 = arith.constant 0.000000e+00 : f32
    %120 = vector.broadcast %cst_48 : f32 to vector<8x512xf32>
    %121 = arith.maximumf %119, %120 : vector<8x512xf32>
    %122 = arith.truncf %121 : vector<8x512xf32> to vector<8x512xbf16>
    %c512_49 = arith.constant 512 : index
    %c0_50 = arith.constant 0 : index
    %123 = vector.load %arg6[%c512_49, %c0_50] : memref<2048x64xbf16, #tpu.memory_space<vmem>>, vector<512x64xbf16>
    %cst_51 = arith.constant dense<0.000000e+00> : vector<8x64xf32>
    %124 = tpu.matmul %122, %123, %cst_51 {dimension_numbers = #tpu.dot_dimension_numbers<[1], [0], [0], [1], [0, 0, 1, 1], [], []>} : vector<8x512xbf16>, vector<512x64xbf16>, vector<8x64xf32> -> vector<8x64xf32>
    %125 = arith.addf %114, %124 : vector<8x64xf32>
    %c0_52 = arith.constant 0 : index
    %c1024 = arith.constant 1024 : index
    %126 = vector.load %arg5[%c0_52, %c1024] : memref<64x2048xbf16, #tpu.memory_space<vmem>>, vector<64x512xbf16>
    %cst_53 = arith.constant dense<0.000000e+00> : vector<8x512xf32>
    %127 = tpu.matmul %102, %126, %cst_53 {dimension_numbers = #tpu.dot_dimension_numbers<[1], [0], [0], [1], [0, 0, 1, 1], [], []>} : vector<8x64xbf16>, vector<64x512xbf16>, vector<8x512xf32> -> vector<8x512xf32>
    %c0_54 = arith.constant 0 : index
    %c1024_55 = arith.constant 1024 : index
    %128 = vector.load %arg9[%c0_54, %c1024_55] : memref<1x2048xf32, #tpu.memory_space<vmem>>, vector<1x512xf32>
    %129 = vector.broadcast %128 : vector<1x512xf32> to vector<8x512xf32>
    %130 = arith.addf %127, %129 : vector<8x512xf32>
    %cst_56 = arith.constant 0.000000e+00 : f32
    %131 = vector.broadcast %cst_56 : f32 to vector<8x512xf32>
    %132 = arith.maximumf %130, %131 : vector<8x512xf32>
    %133 = arith.truncf %132 : vector<8x512xf32> to vector<8x512xbf16>
    %c1024_57 = arith.constant 1024 : index
    %c0_58 = arith.constant 0 : index
    %134 = vector.load %arg6[%c1024_57, %c0_58] : memref<2048x64xbf16, #tpu.memory_space<vmem>>, vector<512x64xbf16>
    %cst_59 = arith.constant dense<0.000000e+00> : vector<8x64xf32>
    %135 = tpu.matmul %133, %134, %cst_59 {dimension_numbers = #tpu.dot_dimension_numbers<[1], [0], [0], [1], [0, 0, 1, 1], [], []>} : vector<8x512xbf16>, vector<512x64xbf16>, vector<8x64xf32> -> vector<8x64xf32>
    %136 = arith.addf %125, %135 : vector<8x64xf32>
    %c0_60 = arith.constant 0 : index
    %c1536 = arith.constant 1536 : index
    %137 = vector.load %arg5[%c0_60, %c1536] : memref<64x2048xbf16, #tpu.memory_space<vmem>>, vector<64x512xbf16>
    %cst_61 = arith.constant dense<0.000000e+00> : vector<8x512xf32>
    %138 = tpu.matmul %102, %137, %cst_61 {dimension_numbers = #tpu.dot_dimension_numbers<[1], [0], [0], [1], [0, 0, 1, 1], [], []>} : vector<8x64xbf16>, vector<64x512xbf16>, vector<8x512xf32> -> vector<8x512xf32>
    %c0_62 = arith.constant 0 : index
    %c1536_63 = arith.constant 1536 : index
    %139 = vector.load %arg9[%c0_62, %c1536_63] : memref<1x2048xf32, #tpu.memory_space<vmem>>, vector<1x512xf32>
    %140 = vector.broadcast %139 : vector<1x512xf32> to vector<8x512xf32>
    %141 = arith.addf %138, %140 : vector<8x512xf32>
    %cst_64 = arith.constant 0.000000e+00 : f32
    %142 = vector.broadcast %cst_64 : f32 to vector<8x512xf32>
    %143 = arith.maximumf %141, %142 : vector<8x512xf32>
    %144 = arith.truncf %143 : vector<8x512xf32> to vector<8x512xbf16>
    %c1536_65 = arith.constant 1536 : index
    %c0_66 = arith.constant 0 : index
    %145 = vector.load %arg6[%c1536_65, %c0_66] : memref<2048x64xbf16, #tpu.memory_space<vmem>>, vector<512x64xbf16>
    %cst_67 = arith.constant dense<0.000000e+00> : vector<8x64xf32>
    %146 = tpu.matmul %144, %145, %cst_67 {dimension_numbers = #tpu.dot_dimension_numbers<[1], [0], [0], [1], [0, 0, 1, 1], [], []>} : vector<8x512xbf16>, vector<512x64xbf16>, vector<8x64xf32> -> vector<8x64xf32>
    %147 = arith.addf %136, %146 : vector<8x64xf32>
    %148 = vector.broadcast %4 : vector<1x64xf32> to vector<8x64xf32>
    %149 = arith.addf %147, %148 : vector<8x64xf32>
    %150 = arith.addf %101, %149 : vector<8x64xf32>
    %cst_68 = arith.constant dense<0.000000e+00> : vector<8xf32>
    %151 = vector.multi_reduction <add>, %150, %cst_68 [1] : vector<8x64xf32> to vector<8xf32>
    %152 = vector.shape_cast %151 : vector<8xf32> to vector<8x1xf32>
    %cst_69 = arith.constant 6.400000e+01 : f32
    %153 = vector.broadcast %cst_69 : f32 to vector<8x1xf32>
    %154 = arith.divf %152, %153 : vector<8x1xf32>
    %155 = vector.broadcast %154 : vector<8x1xf32> to vector<8x64xf32>
    %156 = arith.subf %150, %155 : vector<8x64xf32>
    %157 = arith.mulf %156, %156 : vector<8x64xf32>
    %cst_70 = arith.constant dense<0.000000e+00> : vector<8xf32>
    %158 = vector.multi_reduction <add>, %157, %cst_70 [1] : vector<8x64xf32> to vector<8xf32>
    %159 = vector.shape_cast %158 : vector<8xf32> to vector<8x1xf32>
    %cst_71 = arith.constant 6.400000e+01 : f32
    %160 = vector.broadcast %cst_71 : f32 to vector<8x1xf32>
    %161 = arith.divf %159, %160 : vector<8x1xf32>
    %162 = vector.broadcast %154 : vector<8x1xf32> to vector<8x64xf32>
    %163 = arith.subf %150, %162 : vector<8x64xf32>
    %cst_72 = arith.constant 9.99999974E-6 : f32
    %164 = vector.broadcast %cst_72 : f32 to vector<8x1xf32>
    %165 = arith.addf %161, %164 : vector<8x1xf32>
    %166 = math.rsqrt %165 : vector<8x1xf32>
    %167 = vector.broadcast %166 : vector<8x1xf32> to vector<8x64xf32>
    %168 = arith.mulf %163, %167 : vector<8x64xf32>
    %169 = vector.broadcast %5 : vector<1x64xf32> to vector<8x64xf32>
    %170 = arith.mulf %168, %169 : vector<8x64xf32>
    %171 = vector.broadcast %6 : vector<1x64xf32> to vector<8x64xf32>
    %172 = arith.addf %170, %171 : vector<8x64xf32>
    %173 = tpu.iota {dimensions = array<i32: 0>} : vector<1x8xi32>
    %174 = tpu.iota {dimensions = array<i32: 1>} : vector<1x8xi32>
    %c8_i32 = arith.constant 8 : i32
    %175 = vector.broadcast %c8_i32 : i32 to vector<1x8xi32>
    %176 = arith.muli %173, %175 : vector<1x8xi32>
    %177 = arith.cmpi sge, %174, %176 : vector<1x8xi32>
    %c1_i32 = arith.constant 1 : i32
    %178 = vector.broadcast %c1_i32 : i32 to vector<1x8xi32>
    %179 = arith.addi %173, %178 : vector<1x8xi32>
    %c8_i32_73 = arith.constant 8 : i32
    %180 = vector.broadcast %c8_i32_73 : i32 to vector<1x8xi32>
    %181 = arith.muli %179, %180 : vector<1x8xi32>
    %182 = arith.cmpi slt, %174, %181 : vector<1x8xi32>
    %183 = arith.andi %177, %182 : vector<1x8xi1>
    %cst_74 = arith.constant 1.250000e-01 : f32
    %cst_75 = arith.constant 0.000000e+00 : f32
    %184 = vector.broadcast %cst_74 : f32 to vector<1x8xf32>
    %185 = vector.broadcast %cst_75 : f32 to vector<1x8xf32>
    %186 = arith.select %183, %184, %185 : vector<1x8xi1>, vector<1x8xf32>
    %cst_76 = arith.constant dense<0.000000e+00> : vector<1x64xf32>
    %187 = tpu.matmul %186, %172, %cst_76 {dimension_numbers = #tpu.dot_dimension_numbers<[1], [0], [0], [1], [0, 0, 1, 1], [], []>} : vector<1x8xf32>, vector<8x64xf32>, vector<1x64xf32> -> vector<1x64xf32>
    %188 = vector.shape_cast %187 : vector<1x64xf32> to vector<1x1x64xf32>
    %c0_77 = arith.constant 0 : index
    %c0_78 = arith.constant 0 : index
    %c0_79 = arith.constant 0 : index
    %189 = vector.load %arg10[%c0_77, %c0_78, %c0_79] : memref<1x1x64xf32, #tpu.memory_space<vmem>>, vector<1x1x64xf32>
    tpu.vector_store %arg10[%c0_77, %c0_78, %c0_79], %188 {strides = array<i32>} : memref<1x1x64xf32, #tpu.memory_space<vmem>>, vector<1x1x64xf32>,
    return
  }
  func.func @transform_0(%arg0: i32) -> (i32, i32, i32) {
    %c0_i32 = arith.constant 0 : i32
    %c0_i32_0 = arith.constant 0 : i32
    %c0_i32_1 = arith.constant 0 : i32
    return %arg0, %c0_i32, %c0_i32_0 : i32, i32, i32
  }
  func.func @transform_1(%arg0: i32) -> (i32, i32) {
    %c0_i32 = arith.constant 0 : i32
    %c0_i32_0 = arith.constant 0 : i32
    %c0_i32_1 = arith.constant 0 : i32
    return %c0_i32, %c0_i32_0 : i32, i32
  }
  func.func @transform_2(%arg0: i32) -> (i32, i32) {
    %c0_i32 = arith.constant 0 : i32
    %c0_i32_0 = arith.constant 0 : i32
    %c0_i32_1 = arith.constant 0 : i32
    return %c0_i32, %c0_i32_0 : i32, i32
  }
  func.func @transform_3(%arg0: i32) -> (i32, i32) {
    %c0_i32 = arith.constant 0 : i32
    %c0_i32_0 = arith.constant 0 : i32
    %c0_i32_1 = arith.constant 0 : i32
    return %c0_i32, %c0_i32_0 : i32, i32
  }
  func.func @transform_4(%arg0: i32) -> (i32, i32) {
    %c0_i32 = arith.constant 0 : i32
    %c0_i32_0 = arith.constant 0 : i32
    %c0_i32_1 = arith.constant 0 : i32
    return %c0_i32, %c0_i32_0 : i32, i32
  }
  func.func @transform_5(%arg0: i32) -> (i32, i32) {
    %c0_i32 = arith.constant 0 : i32
    %c0_i32_0 = arith.constant 0 : i32
    %c0_i32_1 = arith.constant 0 : i32
    return %c0_i32, %c0_i32_0 : i32, i32
  }
  func.func @transform_6(%arg0: i32) -> (i32, i32) {
    %c0_i32 = arith.constant 0 : i32
    %c0_i32_0 = arith.constant 0 : i32
    %c0_i32_1 = arith.constant 0 : i32
    return %c0_i32, %c0_i32_0 : i32, i32
  }
  func.func @transform_7(%arg0: i32) -> (i32, i32) {
    %c0_i32 = arith.constant 0 : i32
    %c0_i32_0 = arith.constant 0 : i32
    %c0_i32_1 = arith.constant 0 : i32
    return %c0_i32, %c0_i32_0 : i32, i32
  }
  func.func @transform_8(%arg0: i32) -> (i32, i32) {
    %c0_i32 = arith.constant 0 : i32
    %c0_i32_0 = arith.constant 0 : i32
    %c0_i32_1 = arith.constant 0 : i32
    return %c0_i32, %c0_i32_0 : i32, i32
  }
  func.func @transform_9(%arg0: i32) -> (i32, i32, i32) {
    %c0_i32 = arith.constant 0 : i32
    %c0_i32_0 = arith.constant 0 : i32
    %c0_i32_1 = arith.constant 0 : i32
    return %arg0, %c0_i32, %c0_i32_0 : i32, i32, i32
  }
}

</mosaic_0001>

<llo_original>
// kernel: tpu_custom_call.1
$region0: #{tpu_custom_call.1}
  #allocation0 [shape = 'u32[]', space=smem, size = 0x4, offset = 0x4, fixed_abs, tag = 'smem constant byte address 0x4 - core index']
  #allocation1 [shape = 'u32[72,128]{1,0:T(1,128)}', space=vmem, size = 0x9000, scoped, tag = 'internal scratch']
  %s0 = inlined_call_operand.vmem [shape: f32[2,256,8], index: 0, kind: input, shape index: {}]
  %s1 = inlined_call_operand.vmem [shape: bf16[256,64], index: 1, kind: input, shape index: {}]
  %s2 = inlined_call_operand.vmem [shape: bf16[64,192], index: 2, kind: input, shape index: {}]
  %s3 = inlined_call_operand.vmem [shape: bf16[64,64], index: 3, kind: input, shape index: {}]
  %s4 = inlined_call_operand.vmem [shape: bf16[64,2048], index: 4, kind: input, shape index: {}]
  %s5 = inlined_call_operand.vmem [shape: bf16[2048,64], index: 5, kind: input, shape index: {}]
  %s6 = inlined_call_operand.vmem [shape: f32[7,64], index: 6, kind: input, shape index: {}]
  %s7 = inlined_call_operand.vmem [shape: f32[1,192], index: 7, kind: input, shape index: {}]
  %s8 = inlined_call_operand.vmem [shape: f32[1,2048], index: 8, kind: input, shape index: {}]
  %s9 = inlined_call_operand.hbm [shape: f32[2,1,64], index: 9, kind: output, shape index: {}]
  %s10 = sld [smem:[#allocation0]]
  $region69: #{tpu_custom_call.1} parent=0
    _
  %s12 = ssub.s32 1, %s10
  %s13 = scalar_select 0, %s12, %s10
  $region1: #{tpu_custom_call.1} parent=0
    #allocation2 [shape = 'u8[1024]{0}', space=vmem, size = 0x400, scoped, tag = 'output window, operand 0']
    #allocation3 [shape = 's32[2]{0}', space=sflag, size = 0x8, scoped, tag = 'scoped memory for tpu_custom_call.1']
    %14 = vsyncpa [#allocation3], 0
    %s15 = scalar_lea.sflag [#allocation3], 1
    %16 = vsyncpa %s15, 0
    loop: start=0, step=1, limit=4
    $region2: #{tpu_custom_call.1} parent=1 // loop_pre_header
      _
    $region3: #{tpu_custom_call.1} parent=1 // loop_header
      %s18 = sphi 0, %s22
      %p19 = scmp.ge.s32.totalorder %s18, 4
      %s28 = sphi 0, %s30
      %s31 = sphi 0, %s28
      %s32 = sphi 0, %s31
      %s48 = sphi 0, %s32
      %s52 = sphi 0, %s52
      %s54 = sphi 0, %s52
      %s55 = sphi 0, %s54
      %s69 = sphi 0, %s55
      %s73 = sphi 0, %s73
      %s75 = sphi 0, %s73
      %s76 = sphi 0, %s75
      %s90 = sphi 0, %s76
      %s94 = sphi 0, %s94
      %s96 = sphi 0, %s94
      %s97 = sphi 0, %s96
      %s111 = sphi 0, %s97
      %s115 = sphi 0, %s115
      %s117 = sphi 0, %s115
      %s118 = sphi 0, %s117
      %s132 = sphi 0, %s118
      %s136 = sphi 0, %s136
      %s138 = sphi 0, %s136
      %s139 = sphi 0, %s138
      %s153 = sphi 0, %s139
      %s157 = sphi 0, %s157
      %s159 = sphi 0, %s157
      %s160 = sphi 0, %s159
      %s174 = sphi 0, %s160
      %s178 = sphi 0, %s178
      %s180 = sphi 0, %s178
      %s181 = sphi 0, %s180
      %s195 = sphi 0, %s181
      %s199 = sphi 0, %s199
      %s201 = sphi 0, %s199
      %s202 = sphi 0, %s201
      %s216 = sphi 0, %s202
      %s222 = sphi 0, %s224
      %s225 = sphi 0, %s222
      %s226 = sphi 0, %s225
      %s242 = sphi 0, %s226
    $region4: #{tpu_custom_call.1} parent=1 // loop_header_branch
      %21 = sbr.rel (%p19) target = $region8
    $region5: #{tpu_custom_call.1} parent=1 // loop_body
      %s23 = ssub.s32 %s18, 1
      %s24 = ssub.s32 %s18, 2
      %s25 = sadd.s32 %s18, 1
      %s26 = ssub.s32 %s18, %s25
      %p27 = scmp.eq.s32.totalorder %s26, 0
      %s29 = sadd.s32 %s28, 1
      %s30 = scalar_select %p27, %s28, %s29
      %p33 = pneg %p27
      %p34 = scmp.eq.s32.totalorder %s18, 1
      %p35 = por %p33, %p34
      %p36 = scmp.ne.s32.totalorder %s28, %s31
      %p37 = scmp.eq.s32.totalorder %s18, 0
      %p38 = por %p36, %p37
      %p39 = scmp.ne.s32.totalorder %s28, %s31
      %p40 = scmp.eq.s32.totalorder %s23, 1
      %p41 = por %p39, %p40
      %p42 = scmp.ne.s32.totalorder %s31, %s32
      %p43 = scmp.eq.s32.totalorder %s23, 0
      %p44 = por %p42, %p43
      %p45 = scmp.ne.s32.totalorder %s31, %s32
      %p46 = scmp.eq.s32.totalorder %s24, 1
      %p47 = por %p45, %p46
      %p49 = scmp.ne.s32.totalorder %s32, %s48
      %p50 = scmp.eq.s32.totalorder %s24, 0
      %p51 = por %p49, %p50
      %s53 = sadd.s32 %s52, 1
      %p56 = scmp.eq.s32.totalorder %s18, 1
      %p57 = scmp.ne.s32.totalorder %s52, %s54
      %p58 = scmp.eq.s32.totalorder %s18, 0
      %p59 = por %p57, %p58
      %p60 = scmp.ne.s32.totalorder %s52, %s54
      %p61 = scmp.eq.s32.totalorder %s23, 1
      %p62 = por %p60, %p61
      %p63 = scmp.ne.s32.totalorder %s54, %s55
      %p64 = scmp.eq.s32.totalorder %s23, 0
      %p65 = por %p63, %p64
      %p66 = scmp.ne.s32.totalorder %s54, %s55
      %p67 = scmp.eq.s32.totalorder %s24, 1
      %p68 = por %p66, %p67
      %p70 = scmp.ne.s32.totalorder %s55, %s69
      %p71 = scmp.eq.s32.totalorder %s24, 0
      %p72 = por %p70, %p71
      %s74 = sadd.s32 %s73, 1
      %p77 = scmp.eq.s32.totalorder %s18, 1
      %p78 = scmp.ne.s32.totalorder %s73, %s75
      %p79 = scmp.eq.s32.totalorder %s18, 0
      %p80 = por %p78, %p79
      %p81 = scmp.ne.s32.totalorder %s73, %s75
      %p82 = scmp.eq.s32.totalorder %s23, 1
      %p83 = por %p81, %p82
      %p84 = scmp.ne.s32.totalorder %s75, %s76
      %p85 = scmp.eq.s32.totalorder %s23, 0
      %p86 = por %p84, %p85
      %p87 = scmp.ne.s32.totalorder %s75, %s76
      %p88 = scmp.eq.s32.totalorder %s24, 1
      %p89 = por %p87, %p88
      %p91 = scmp.ne.s32.totalorder %s76, %s90
      %p92 = scmp.eq.s32.totalorder %s24, 0
      %p93 = por %p91, %p92
      %s95 = sadd.s32 %s94, 1
      %p98 = scmp.eq.s32.totalorder %s18, 1
      %p99 = scmp.ne.s32.totalorder %s94, %s96
      %p100 = scmp.eq.s32.totalorder %s18, 0
      %p101 = por %p99, %p100
      %p102 = scmp.ne.s32.totalorder %s94, %s96
      %p103 = scmp.eq.s32.totalorder %s23, 1
      %p104 = por %p102, %p103
      %p105 = scmp.ne.s32.totalorder %s96, %s97
      %p106 = scmp.eq.s32.totalorder %s23, 0
      %p107 = por %p105, %p106
      %p108 = scmp.ne.s32.totalorder %s96, %s97
      %p109 = scmp.eq.s32.totalorder %s24, 1
      %p110 = por %p108, %p109
      %p112 = scmp.ne.s32.totalorder %s97, %s111
      %p113 = scmp.eq.s32.totalorder %s24, 0
      %p114 = por %p112, %p113
      %s116 = sadd.s32 %s115, 1
      %p119 = scmp.eq.s32.totalorder %s18, 1
      %p120 = scmp.ne.s32.totalorder %s115, %s117
      %p121 = scmp.eq.s32.totalorder %s18, 0
      %p122 = por %p120, %p121
      %p123 = scmp.ne.s32.totalorder %s115, %s117
      %p124 = scmp.eq.s32.totalorder %s23, 1
      %p125 = por %p123, %p124
      %p126 = scmp.ne.s32.totalorder %s117, %s118
      %p127 = scmp.eq.s32.totalorder %s23, 0
      %p128 = por %p126, %p127
      %p129 = scmp.ne.s32.totalorder %s117, %s118
      %p130 = scmp.eq.s32.totalorder %s24, 1
      %p131 = por %p129, %p130
      %p133 = scmp.ne.s32.totalorder %s118, %s132
      %p134 = scmp.eq.s32.totalorder %s24, 0
      %p135 = por %p133, %p134
      %s137 = sadd.s32 %s136, 1
      %p140 = scmp.eq.s32.totalorder %s18, 1
      %p141 = scmp.ne.s32.totalorder %s136, %s138
      %p142 = scmp.eq.s32.totalorder %s18, 0
      %p143 = por %p141, %p142
      %p144 = scmp.ne.s32.totalorder %s136, %s138
      %p145 = scmp.eq.s32.totalorder %s23, 1
      %p146 = por %p144, %p145
      %p147 = scmp.ne.s32.totalorder %s138, %s139
      %p148 = scmp.eq.s32.totalorder %s23, 0
      %p149 = por %p147, %p148
      %p150 = scmp.ne.s32.totalorder %s138, %s139
      %p151 = scmp.eq.s32.totalorder %s24, 1
      %p152 = por %p150, %p151
      %p154 = scmp.ne.s32.totalorder %s139, %s153
      %p155 = scmp.eq.s32.totalorder %s24, 0
      %p156 = por %p154, %p155
      %s158 = sadd.s32 %s157, 1
      %p161 = scmp.eq.s32.totalorder %s18, 1
      %p162 = scmp.ne.s32.totalorder %s157, %s159
      %p163 = scmp.eq.s32.totalorder %s18, 0
      %p164 = por %p162, %p163
      %p165 = scmp.ne.s32.totalorder %s157, %s159
      %p166 = scmp.eq.s32.totalorder %s23, 1
      %p167 = por %p165, %p166
      %p168 = scmp.ne.s32.totalorder %s159, %s160
      %p169 = scmp.eq.s32.totalorder %s23, 0
      %p170 = por %p168, %p169
      %p171 = scmp.ne.s32.totalorder %s159, %s160
      %p172 = scmp.eq.s32.totalorder %s24, 1
      %p173 = por %p171, %p172
      %p175 = scmp.ne.s32.totalorder %s160, %s174
      %p176 = scmp.eq.s32.totalorder %s24, 0
      %p177 = por %p175, %p176
      %s179 = sadd.s32 %s178, 1
      %p182 = scmp.eq.s32.totalorder %s18, 1
      %p183 = scmp.ne.s32.totalorder %s178, %s180
      %p184 = scmp.eq.s32.totalorder %s18, 0
      %p185 = por %p183, %p184
      %p186 = scmp.ne.s32.totalorder %s178, %s180
      %p187 = scmp.eq.s32.totalorder %s23, 1
      %p188 = por %p186, %p187
      %p189 = scmp.ne.s32.totalorder %s180, %s181
      %p190 = scmp.eq.s32.totalorder %s23, 0
      %p191 = por %p189, %p190
      %p192 = scmp.ne.s32.totalorder %s180, %s181
      %p193 = scmp.eq.s32.totalorder %s24, 1
      %p194 = por %p192, %p193
      %p196 = scmp.ne.s32.totalorder %s181, %s195
      %p197 = scmp.eq.s32.totalorder %s24, 0
      %p198 = por %p196, %p197
      %s200 = sadd.s32 %s199, 1
      %p203 = scmp.eq.s32.totalorder %s18, 1
      %p204 = scmp.ne.s32.totalorder %s199, %s201
      %p205 = scmp.eq.s32.totalorder %s18, 0
      %p206 = por %p204, %p205
      %p207 = scmp.ne.s32.totalorder %s199, %s201
      %p208 = scmp.eq.s32.totalorder %s23, 1
      %p209 = por %p207, %p208
      %p210 = scmp.ne.s32.totalorder %s201, %s202
      %p211 = scmp.eq.s32.totalorder %s23, 0
      %p212 = por %p210, %p211
      %p213 = scmp.ne.s32.totalorder %s201, %s202
      %p214 = scmp.eq.s32.totalorder %s24, 1
      %p215 = por %p213, %p214
      %p217 = scmp.ne.s32.totalorder %s202, %s216
      %p218 = scmp.eq.s32.totalorder %s24, 0
      %p219 = por %p217, %p218
      %s220 = ssub.s32 %s18, %s25
      %p221 = scmp.eq.s32.totalorder %s220, 0
      %s223 = sadd.s32 %s222, 1
      %s224 = scalar_select %p221, %s222, %s223
      %p227 = pneg %p221
      %p228 = scmp.eq.s32.totalorder %s18, 1
      %p229 = por %p227, %p228
      %p230 = scmp.ne.s32.totalorder %s222, %s225
      %p231 = scmp.eq.s32.totalorder %s18, 0
      %p232 = por %p230, %p231
      %p233 = scmp.ne.s32.totalorder %s222, %s225
      %p234 = scmp.eq.s32.totalorder %s23, 1
      %p235 = por %p233, %p234
      %p236 = scmp.ne.s32.totalorder %s225, %s226
      %p237 = scmp.eq.s32.totalorder %s23, 0
      %p238 = por %p236, %p237
      %p239 = scmp.ne.s32.totalorder %s225, %s226
      %p240 = scmp.eq.s32.totalorder %s24, 1
      %p241 = por %p239, %p240
      %p243 = scmp.ne.s32.totalorder %s226, %s242
      %p244 = scmp.eq.s32.totalorder %s24, 0
      %p245 = por %p243, %p244
      %p246 = scmp.le.s32.totalorder 1, %s18
      %p247 = scmp.lt.s32.totalorder %s18, 3
      %p248 = pnand %p246, %p247
      %p249 = pneg %p248
      // Predicated region
      $region9: #{tpu_custom_call.1} parent=5 // pred_check
        _
      $region10: #{tpu_custom_call.1} parent=5 // pred_check_branch
        %251 = sbr.rel (%p248) target = $region12
      $region11: #{tpu_custom_call.1} parent=5 // pred_region
        %s252 = ssub.s32 %s18, 1
        // Predicated region
        $region13: #{tpu_custom_call.1} parent=11 // pred_check
          %p253 = pneg %p65
        $region14: #{tpu_custom_call.1} parent=11 // pred_check_branch
          %255 = sbr.rel (%p253) target = $region16
        $region15: #{tpu_custom_call.1} parent=11 // pred_region
          _
        $region16: #{tpu_custom_call.1} parent=11 // pred_fallthru
          _
        // Predicated region
        $region17: #{tpu_custom_call.1} parent=11 // pred_check
          %p256 = pneg %p86
        $region18: #{tpu_custom_call.1} parent=11 // pred_check_branch
          %258 = sbr.rel (%p256) target = $region20
        $region19: #{tpu_custom_call.1} parent=11 // pred_region
          _
        $region20: #{tpu_custom_call.1} parent=11 // pred_fallthru
          _
        // Predicated region
        $region21: #{tpu_custom_call.1} parent=11 // pred_check
          %p259 = pneg %p107
        $region22: #{tpu_custom_call.1} parent=11 // pred_check_branch
          %261 = sbr.rel (%p259) target = $region24
        $region23: #{tpu_custom_call.1} parent=11 // pred_region
          _
        $region24: #{tpu_custom_call.1} parent=11 // pred_fallthru
          _
        // Predicated region
        $region25: #{tpu_custom_call.1} parent=11 // pred_check
          %p262 = pneg %p128
        $region26: #{tpu_custom_call.1} parent=11 // pred_check_branch
          %264 = sbr.rel (%p262) target = $region28
        $region27: #{tpu_custom_call.1} parent=11 // pred_region
          _
        $region28: #{tpu_custom_call.1} parent=11 // pred_fallthru
          _
        // Predicated region
        $region29: #{tpu_custom_call.1} parent=11 // pred_check
          %p265 = pneg %p149
        $region30: #{tpu_custom_call.1} parent=11 // pred_check_branch
          %267 = sbr.rel (%p265) target = $region32
        $region31: #{tpu_custom_call.1} parent=11 // pred_region
          _
        $region32: #{tpu_custom_call.1} parent=11 // pred_fallthru
          _
        // Predicated region
        $region33: #{tpu_custom_call.1} parent=11 // pred_check
          %p268 = pneg %p170
        $region34: #{tpu_custom_call.1} parent=11 // pred_check_branch
          %270 = sbr.rel (%p268) target = $region36
        $region35: #{tpu_custom_call.1} parent=11 // pred_region
          _
        $region36: #{tpu_custom_call.1} parent=11 // pred_fallthru
          _
        // Predicated region
        $region37: #{tpu_custom_call.1} parent=11 // pred_check
          %p271 = pneg %p191
        $region38: #{tpu_custom_call.1} parent=11 // pred_check_branch
          %273 = sbr.rel (%p271) target = $region40
        $region39: #{tpu_custom_call.1} parent=11 // pred_region
          _
        $region40: #{tpu_custom_call.1} parent=11 // pred_fallthru
          _
        // Predicated region
        $region41: #{tpu_custom_call.1} parent=11 // pred_check
          %p274 = pneg %p212
        $region42: #{tpu_custom_call.1} parent=11 // pred_check_branch
          %276 = sbr.rel (%p274) target = $region44
        $region43: #{tpu_custom_call.1} parent=11 // pred_region
          _
        $region44: #{tpu_custom_call.1} parent=11 // pred_fallthru
          _
      $region12: #{tpu_custom_call.1} parent=5 // pred_fallthru
        _
      %p277 = scmp.lt.s32.totalorder %s18, 2
      // Predicated region
      $region45: #{tpu_custom_call.1} parent=5 // pred_check
        %p278 = pneg %p277
      $region46: #{tpu_custom_call.1} parent=5 // pred_check_branch
        %280 = sbr.rel (%p278) target = $region48
      $region47: #{tpu_custom_call.1} parent=5 // pred_region
        // Predicated region
        $region49: #{tpu_custom_call.1} parent=47 // pred_check
          %p281 = pneg %p38
        $region50: #{tpu_custom_call.1} parent=47 // pred_check_branch
          %283 = sbr.rel (%p281) target = $region52
        $region51: #{tpu_custom_call.1} parent=47 // pred_region
          %p284 = scmp.lt.s32.totalorder %s18, 1
          %s285 = scalar_select %p284, %s18, 1
          %s286 = smul.addr %s285, 32
          %s287 = smul.addr %s286, 8
          %s288 = scalar_lea.vmem %s0, %s287
        $region52: #{tpu_custom_call.1} parent=47 // pred_fallthru
          _
      $region48: #{tpu_custom_call.1} parent=5 // pred_fallthru
        _
      %p289 = scmp.le.s32.totalorder 1, %s18
      %p290 = scmp.lt.s32.totalorder %s18, 3
      %p291 = pnand %p289, %p290
      %p292 = pneg %p291
      // Predicated region
      $region53: #{tpu_custom_call.1} parent=5 // pred_check
        _
      $region54: #{tpu_custom_call.1} parent=5 // pred_check_branch
        %294 = sbr.rel (%p291) target = $region56
      $region55: #{tpu_custom_call.1} parent=5 // pred_region
        %s295 = ssub.s32 %s18, 1
        %p296 = scmp.lt.s32.totalorder %s23, 1
        %s297 = scalar_select %p296, %s23, 1
        %s298 = smul.addr %s297, 32
        %s299 = smul.addr %s298, 8
        %s300 = scalar_lea.vmem %s0, %s299
        %p301 = pneg %p44
        %p302 = pneg %p41
        %p303 = pneg %p65
        %p304 = pneg %p62
        %p305 = pneg %p86
        %p306 = pneg %p83
        %p307 = pneg %p107
        %p308 = pneg %p104
        %p309 = pneg %p128
        %p310 = pneg %p125
        %p311 = pneg %p149
        %p312 = pneg %p146
        %p313 = pneg %p170
        %p314 = pneg %p167
        %p315 = pneg %p191
        %p316 = pneg %p188
        %p317 = pneg %p212
        %p318 = pneg %p209
        %p319 = pneg %p238
        %p320 = pneg %p235
        %s321 = sand.u32 %s225, 1
        %s322 = scalar_lea.sflag [#allocation3], %s321
        %s323 = sand.u32 %s225, 1
        %s324 = scalar_lea.vmem [#allocation2], %s323
        %p325 = scmp.lt.s32.totalorder %s23, 1
        %s326 = scalar_select %p325, %s23, 1
        %s327 = smul.addr %s326, 32
        %s328 = smul.addr %s327, 8
        %s329 = scalar_lea.vmem %s0, %s328
        %v331 = vld [vmem:[%s6] sm:$0x1]
        %v332 = vld [vmem:[%s6 + $0x1] sm:$0x1]
        %v333 = vld [vmem:[%s6 + $0x2] sm:$0x1]
        %v334 = vld [vmem:[%s6 + $0x3] sm:$0x1]
        %v335 = vld [vmem:[%s6 + $0x4] sm:$0x1]
        %v336 = vld [vmem:[%s6 + $0x5] sm:$0x1]
        %v337 = vld [vmem:[%s6 + $0x6] sm:$0x1]
        %v338 = vld [vmem:[%s329] sm:$0xff]
        %v339 = vld [vmem:[%s329 + $0x8] sm:$0xff]
        %v340 = vld [vmem:[%s329 + $0x10] sm:$0xff]
        %v341 = vld [vmem:[%s329 + $0x18] sm:$0xff]
        %v342 = vld [vmem:[%s329 + $0x20] sm:$0xff]
        %v343 = vld [vmem:[%s329 + $0x28] sm:$0xff]
        %v344 = vld [vmem:[%s329 + $0x30] sm:$0xff]
        %v345 = vld [vmem:[%s329 + $0x38] sm:$0xff]
        %v346 = vld [vmem:[%s329 + $0x40] sm:$0xff]
        %v347 = vld [vmem:[%s329 + $0x48] sm:$0xff]
        %v348 = vld [vmem:[%s329 + $0x50] sm:$0xff]
        %v349 = vld [vmem:[%s329 + $0x58] sm:$0xff]
        %v350 = vld [vmem:[%s329 + $0x60] sm:$0xff]
        %v351 = vld [vmem:[%s329 + $0x68] sm:$0xff]
        %v352 = vld [vmem:[%s329 + $0x70] sm:$0xff]
        %v353 = vld [vmem:[%s329 + $0x78] sm:$0xff]
        %v354 = vld [vmem:[%s329 + $0x80] sm:$0xff]
        %v355 = vld [vmem:[%s329 + $0x88] sm:$0xff]
        %v356 = vld [vmem:[%s329 + $0x90] sm:$0xff]
        %v357 = vld [vmem:[%s329 + $0x98] sm:$0xff]
        %v358 = vld [vmem:[%s329 + $0xa0] sm:$0xff]
        %v359 = vld [vmem:[%s329 + $0xa8] sm:$0xff]
        %v360 = vld [vmem:[%s329 + $0xb0] sm:$0xff]
        %v361 = vld [vmem:[%s329 + $0xb8] sm:$0xff]
        %v362 = vld [vmem:[%s329 + $0xc0] sm:$0xff]
        %v363 = vld [vmem:[%s329 + $0xc8] sm:$0xff]
        %v364 = vld [vmem:[%s329 + $0xd0] sm:$0xff]
        %v365 = vld [vmem:[%s329 + $0xd8] sm:$0xff]
        %v366 = vld [vmem:[%s329 + $0xe0] sm:$0xff]
        %v367 = vld [vmem:[%s329 + $0xe8] sm:$0xff]
        %v368 = vld [vmem:[%s329 + $0xf0] sm:$0xff]
        %v369 = vld [vmem:[%s329 + $0xf8] sm:$0xff]
        %v370 = vlaneseq
        %v371 = vshrl.u32 %v370, 7
        %v372 = vlaneseq
        %v373 = vand.u32 %v372, 127
        %vm374 = vcmp.eq.s32.totalorder %v371, %v373
        %v375 = vsel %vm374, 1, 0
        %v376 = vcvt.s32.f32 %v375
        %vm377 = vcmask 64512
        %v379 = vsel %vm377, %v376, 0
        %v382 = vsel %vm377, %v338, 0
        %v385 = vsel %vm377, %v339, 0
        %v388 = vsel %vm377, %v340, 0
        %v391 = vsel %vm377, %v341, 0
        %v394 = vsel %vm377, %v342, 0
        %v397 = vsel %vm377, %v343, 0
        %v400 = vsel %vm377, %v344, 0
        %v403 = vsel %vm377, %v345, 0
        %v406 = vsel %vm377, %v346, 0
        %v409 = vsel %vm377, %v347, 0
        %v412 = vsel %vm377, %v348, 0
        %v415 = vsel %vm377, %v349, 0
        %v418 = vsel %vm377, %v350, 0
        %v421 = vsel %vm377, %v351, 0
        %v424 = vsel %vm377, %v352, 0
        %v427 = vsel %vm377, %v353, 0
        %v430 = vsel %vm377, %v354, 0
        %v433 = vsel %vm377, %v355, 0
        %v436 = vsel %vm377, %v356, 0
        %v439 = vsel %vm377, %v357, 0
        %v442 = vsel %vm377, %v358, 0
        %v445 = vsel %vm377, %v359, 0
        %v448 = vsel %vm377, %v360, 0
        %v451 = vsel %vm377, %v361, 0
        %v454 = vsel %vm377, %v362, 0
        %v457 = vsel %vm377, %v363, 0
        %v460 = vsel %vm377, %v364, 0
        %v463 = vsel %vm377, %v365, 0
        %v466 = vsel %vm377, %v366, 0
        %v469 = vsel %vm377, %v367, 0
        %v472 = vsel %vm377, %v368, 0
        %v475 = vsel %vm377, %v369, 0
        %477 = vmatpush.xpose.msra.mxu0 %v427
        %478 = vmatpush.xpose.msra.mxu0 %v424
        %479 = vmatpush.xpose.msra.mxu0 %v421
        %480 = vmatpush.xpose.msra.mxu0 %v418
        %481 = vmatpush.xpose.msra.mxu0 %v415
        %482 = vmatpush.xpose.msra.mxu0 %v412
        %483 = vmatpush.xpose.msra.mxu0 %v409
        %484 = vmatpush.xpose.msra.mxu0 %v406
        %485 = vmatpush.xpose.msra.mxu0 %v403
        %486 = vmatpush.xpose.msra.mxu0 %v400
        %487 = vmatpush.xpose.msra.mxu0 %v397
        %488 = vmatpush.xpose.msra.mxu0 %v394
        %489 = vmatpush.xpose.msra.mxu0 %v391
        %490 = vmatpush.xpose.msra.mxu0 %v388
        %491 = vmatpush.xpose.msra.mxu0 %v385
        %492 = vmatpush.xpose.msra.mxu0 %v382
        %493 = vmatmul.f32.gmra.mxu0 %v379
        %v494 = vpop.f32.mrf.mxu0
        %v495 = vadd.f32 0.0, %v494
        %496 = vdwg.mxu0
        %497 = vmatpush.xpose.msra.mxu0 %v475
        %498 = vmatpush.xpose.msra.mxu0 %v472
        %499 = vmatpush.xpose.msra.mxu0 %v469
        %500 = vmatpush.xpose.msra.mxu0 %v466
        %501 = vmatpush.xpose.msra.mxu0 %v463
        %502 = vmatpush.xpose.msra.mxu0 %v460
        %503 = vmatpush.xpose.msra.mxu0 %v457
        %504 = vmatpush.xpose.msra.mxu0 %v454
        %505 = vmatpush.xpose.msra.mxu0 %v451
        %506 = vmatpush.xpose.msra.mxu0 %v448
        %507 = vmatpush.xpose.msra.mxu0 %v445
        %508 = vmatpush.xpose.msra.mxu0 %v442
        %509 = vmatpush.xpose.msra.mxu0 %v439
        %510 = vmatpush.xpose.msra.mxu0 %v436
        %511 = vmatpush.xpose.msra.mxu0 %v433
        %512 = vmatpush.xpose.msra.mxu0 %v430
        %513 = vmatmul.f32.gmra.mxu0 %v379
        %v514 = vpop.f32.mrf.mxu0
        %v515 = vadd.f32 0.0, %v514
        %516 = vdwg.mxu0
        %v517 = vpack.c.bf16 %v495, %v495
        %v518 = vpack.c.bf16 %v515, %v515
        %v519 = vld [vmem:[%s1] sm:$0xf]
        %v520 = vld [vmem:[%s1 + $0x4] sm:$0xf]
        %v521 = vld [vmem:[%s1 + $0x8] sm:$0xf]
        %v522 = vld [vmem:[%s1 + $0xc] sm:$0xf]
        %v523 = vld [vmem:[%s1 + $0x10] sm:$0xf]
        %v524 = vld [vmem:[%s1 + $0x14] sm:$0xf]
        %v525 = vld [vmem:[%s1 + $0x18] sm:$0xf]
        %v526 = vld [vmem:[%s1 + $0x1c] sm:$0xf]
        %v527 = vld [vmem:[%s1 + $0x20] sm:$0xf]
        %v528 = vld [vmem:[%s1 + $0x24] sm:$0xf]
        %v529 = vld [vmem:[%s1 + $0x28] sm:$0xf]
        %v530 = vld [vmem:[%s1 + $0x2c] sm:$0xf]
        %v531 = vld [vmem:[%s1 + $0x30] sm:$0xf]
        %v532 = vld [vmem:[%s1 + $0x34] sm:$0xf]
        %v533 = vld [vmem:[%s1 + $0x38] sm:$0xf]
        %v534 = vld [vmem:[%s1 + $0x3c] sm:$0xf]
        %v535 = vld [vmem:[%s1 + $0x40] sm:$0xf]
        %v536 = vld [vmem:[%s1 + $0x44] sm:$0xf]
        %v537 = vld [vmem:[%s1 + $0x48] sm:$0xf]
        %v538 = vld [vmem:[%s1 + $0x4c] sm:$0xf]
        %v539 = vld [vmem:[%s1 + $0x50] sm:$0xf]
        %v540 = vld [vmem:[%s1 + $0x54] sm:$0xf]
        %v541 = vld [vmem:[%s1 + $0x58] sm:$0xf]
        %v542 = vld [vmem:[%s1 + $0x5c] sm:$0xf]
        %v543 = vld [vmem:[%s1 + $0x60] sm:$0xf]
        %v544 = vld [vmem:[%s1 + $0x64] sm:$0xf]
        %v545 = vld [vmem:[%s1 + $0x68] sm:$0xf]
        %v546 = vld [vmem:[%s1 + $0x6c] sm:$0xf]
        %v547 = vld [vmem:[%s1 + $0x70] sm:$0xf]
        %v548 = vld [vmem:[%s1 + $0x74] sm:$0xf]
        %v549 = vld [vmem:[%s1 + $0x78] sm:$0xf]
        %v550 = vld [vmem:[%s1 + $0x7c] sm:$0xf]
        %v551 = vperm.slane %v331, 0
        %v584 = vunpack.c.l.b16 %v519
        %v585 = vunpack.c.l.b16 %v520
        %v586 = vunpack.c.l.b16 %v521
        %v587 = vunpack.c.l.b16 %v522
        %v588 = vunpack.c.l.b16 %v523
        %v589 = vunpack.c.l.b16 %v524
        %v590 = vunpack.c.l.b16 %v525
        %v591 = vunpack.c.l.b16 %v526
        %v592 = vunpack.c.l.b16 %v527
        %v593 = vunpack.c.l.b16 %v528
        %v594 = vunpack.c.l.b16 %v529
        %v595 = vunpack.c.l.b16 %v530
        %v596 = vunpack.c.l.b16 %v531
        %v597 = vunpack.c.l.b16 %v532
        %v598 = vunpack.c.l.b16 %v533
        %v599 = vunpack.c.l.b16 %v534
        %v600 = vunpack.c.l.b16 %v535
        %v601 = vunpack.c.l.b16 %v536
        %v602 = vunpack.c.l.b16 %v537
        %v603 = vunpack.c.l.b16 %v538
        %v604 = vunpack.c.l.b16 %v539
        %v605 = vunpack.c.l.b16 %v540
        %v606 = vunpack.c.l.b16 %v541
        %v607 = vunpack.c.l.b16 %v542
        %v608 = vunpack.c.l.b16 %v543
        %v609 = vunpack.c.l.b16 %v544
        %v610 = vunpack.c.l.b16 %v545
        %v611 = vunpack.c.l.b16 %v546
        %v612 = vunpack.c.l.b16 %v547
        %v613 = vunpack.c.l.b16 %v548
        %v614 = vunpack.c.l.b16 %v549
        %v615 = vunpack.c.l.b16 %v550
        %v616 = vpack.c.b16 %v585, %v584
        %v617 = vpack.c.b16 %v587, %v586
        %v618 = vpack.c.b16 %v589, %v588
        %v619 = vpack.c.b16 %v591, %v590
        %v620 = vpack.c.b16 %v593, %v592
        %v621 = vpack.c.b16 %v595, %v594
        %v622 = vpack.c.b16 %v597, %v596
        %v623 = vpack.c.b16 %v599, %v598
        %v624 = vpack.c.b16 %v601, %v600
        %v625 = vpack.c.b16 %v603, %v602
        %v626 = vpack.c.b16 %v605, %v604
        %v627 = vpack.c.b16 %v607, %v606
        %v628 = vpack.c.b16 %v609, %v608
        %v629 = vpack.c.b16 %v611, %v610
        %v630 = vpack.c.b16 %v613, %v612
        %v631 = vpack.c.b16 %v615, %v614
        %648 = vmatpush.bf16.msra.mxu0 %v623
        %649 = vmatpush.bf16.msra.mxu0 %v622
        %650 = vmatpush.bf16.msra.mxu0 %v621
        %651 = vmatpush.bf16.msra.mxu0 %v620
        %652 = vmatpush.bf16.msra.mxu0 %v619
        %653 = vmatpush.bf16.msra.mxu0 %v618
        %654 = vmatpush.bf16.msra.mxu0 %v617
        %655 = vmatpush.bf16.msra.mxu0 %v616
        %656 = vmatmul.bf16.gmra.mxu0 %v517
        %v657 = vpop.f32.mrf.mxu0
        %v658 = vadd.f32 %v551, %v657
        %v659 = vpop.f32.mrf.mxu0
        %660 = vdwg.mxu0
        %661 = vmatpush.bf16.msra.mxu0 %v631
        %662 = vmatpush.bf16.msra.mxu0 %v630
        %663 = vmatpush.bf16.msra.mxu0 %v629
        %664 = vmatpush.bf16.msra.mxu0 %v628
        %665 = vmatpush.bf16.msra.mxu0 %v627
        %666 = vmatpush.bf16.msra.mxu0 %v626
        %667 = vmatpush.bf16.msra.mxu0 %v625
        %668 = vmatpush.bf16.msra.mxu0 %v624
        %669 = vmatmul.bf16.gmra.mxu0 %v518
        %v670 = vpop.f32.mrf.mxu0
        %v671 = vadd.f32 %v658, %v670
        %v672 = vpop.f32.mrf.mxu0
        %673 = vdwg.mxu0
        %v674 = vpack.c.bf16 %v671, %v671
        %v675 = vld [vmem:[%s2] sm:$0xff]
        %v676 = vld [vmem:[%s2 + $0x8] sm:$0xff]
        %v677 = vld [vmem:[%s2 + $0x10] sm:$0xff]
        %v678 = vld [vmem:[%s2 + $0x18] sm:$0xff]
        %v679 = vld [vmem:[%s2 + $0x20] sm:$0xff]
        %v680 = vld [vmem:[%s2 + $0x28] sm:$0xff]
        %v681 = vld [vmem:[%s2 + $0x30] sm:$0xff]
        %v682 = vld [vmem:[%s2 + $0x38] sm:$0xff]
        %v683 = vld [vmem:[%s7] sm:$0x3]
        %v685 = vperm.slane %v683, 0
        %v686 = vperm.slane %v683, 1
        %v697 = vunpack.c.l.b16 %v675
        %v698 = vunpack.c.h.b16 %v675
        %v699 = vunpack.c.l.b16 %v676
        %v700 = vunpack.c.h.b16 %v676
        %v701 = vunpack.c.l.b16 %v677
        %v702 = vunpack.c.h.b16 %v677
        %v703 = vunpack.c.l.b16 %v678
        %v704 = vunpack.c.h.b16 %v678
        %v705 = vunpack.c.l.b16 %v679
        %v706 = vunpack.c.h.b16 %v679
        %v707 = vunpack.c.l.b16 %v680
        %v708 = vunpack.c.h.b16 %v680
        %v709 = vunpack.c.l.b16 %v681
        %v710 = vunpack.c.h.b16 %v681
        %v711 = vunpack.c.l.b16 %v682
        %v712 = vunpack.c.h.b16 %v682
        %v713 = vpack.c.b16 %v699, %v697
        %v714 = vpack.c.b16 %v700, %v698
        %v715 = vpack.c.b16 %v703, %v701
        %v716 = vpack.c.b16 %v704, %v702
        %v717 = vpack.c.b16 %v707, %v705
        %v718 = vpack.c.b16 %v708, %v706
        %v719 = vpack.c.b16 %v711, %v709
        %v720 = vpack.c.b16 %v712, %v710
        %vm729 = vcmask 523264
        %v731 = vsel %vm729, %v674, 0
        %733 = vmatpush.bf16.msra.mxu0 0
        %734 = vmatpush.bf16.msra.mxu0 0
        %735 = vmatpush.bf16.msra.mxu0 0
        %736 = vmatpush.bf16.msra.mxu0 0
        %737 = vmatpush.bf16.msra.mxu0 %v719
        %738 = vmatpush.bf16.msra.mxu0 %v717
        %739 = vmatpush.bf16.msra.mxu0 %v715
        %740 = vmatpush.bf16.msra.mxu0 %v713
        %741 = vmatmul.bf16.gmra.mxu0 %v731
        %v742 = vpop.f32.mrf.mxu0
        %v743 = vadd.f32 %v685, %v742
        %v744 = vpop.f32.mrf.mxu0
        %745 = vdwg.mxu0
        %746 = vmatpush.bf16.msra.mxu0 0
        %747 = vmatpush.bf16.msra.mxu0 0
        %748 = vmatpush.bf16.msra.mxu0 0
        %749 = vmatpush.bf16.msra.mxu0 0
        %750 = vmatpush.bf16.msra.mxu0 %v720
        %751 = vmatpush.bf16.msra.mxu0 %v718
        %752 = vmatpush.bf16.msra.mxu0 %v716
        %753 = vmatpush.bf16.msra.mxu0 %v714
        %754 = vmatmul.bf16.gmra.mxu0 %v731
        %v755 = vpop.f32.mrf.mxu0
        %v756 = vadd.f32 %v686, %v755
        %v757 = vpop.f32.mrf.mxu0
        %758 = vdwg.mxu0
        %v759 = vpack.c.bf16 %v743, %v743
        %v760 = vpack.c.bf16 %v756, %v756
        %v762 = vunpack.c.l.b16 %v759
        %v763 = vpack.c.b16 %v762, %v762
        %764 = vrot.lane.b32.xlu0 %v763, 64
        %v765 = vpop.permute.xlu0 %764
        %vm766 = vcmask 261120
        %v768 = vsel %vm766, %v759, 0
        %v771 = vsel %vm766, %v765, 0
        %773 = vmatpush.bf16.xpose.msra.mxu0 0
        %774 = vmatpush.bf16.xpose.msra.mxu0 0
        %775 = vmatpush.bf16.xpose.msra.mxu0 0
        %776 = vmatpush.bf16.xpose.msra.mxu0 0
        %777 = vmatpush.bf16.xpose.msra.mxu0 0
        %778 = vmatpush.bf16.xpose.msra.mxu0 0
        %779 = vmatpush.bf16.xpose.msra.mxu0 0
        %780 = vmatpush.bf16.xpose.msra.mxu0 %v771
        %781 = vmatmul.bf16.gmra.mxu0 %v768
        %v782 = vpop.f32.mrf.mxu0
        %v783 = vadd.f32 0.0, %v782
        %v784 = vpop.f32.mrf.mxu0
        %785 = vdwg.mxu0
        %v786 = vsel %vm377, %v783, -inf
        %787 = vmax.xlane.f32.xlu0 %v786
        %v788 = vpop.xlane.xlu0 %787
        %v789 = vsub.f32 %v783, %v788
        %v790 = vmul.f32 %v789, 1.442695
        %v791 = vpow.pop %v790
        %v792 = vsel %vm377, %v791, 0.0
        %793 = vadd.xlane.f32.xlu0 %v792
        %v794 = vpop.xlane.xlu0 %793
        %v795 = vrcp.pop %v794
        %v796 = vmul.f32 %v791, %v795
        %v797 = vpack.c.bf16 %v796, %v796
        %v799 = vsel %vm377, %v797, 0
        %vm801 = vcmask 1043456
        %v803 = vsel %vm801, %v760, 0
        %805 = vmatpush.bf16.msra.mxu0 0
        %806 = vmatpush.bf16.msra.mxu0 0
        %807 = vmatpush.bf16.msra.mxu0 0
        %808 = vmatpush.bf16.msra.mxu0 0
        %809 = vmatpush.bf16.msra.mxu0 0
        %810 = vmatpush.bf16.msra.mxu0 0
        %811 = vmatpush.bf16.msra.mxu0 0
        %812 = vmatpush.bf16.msra.mxu0 %v803
        %813 = vmatmul.bf16.gmra.mxu0 %v799
        %v814 = vpop.f32.mrf.mxu0
        %v815 = vadd.f32 0.0, %v814
        %v816 = vpop.f32.mrf.mxu0
        %817 = vdwg.mxu0
        %818 = vrot.lane.b32.xlu0 %v763, 96
        %v819 = vpop.permute.xlu0 %818
        %820 = vrot.lane.b32.xlu0 %v763, 32
        %v821 = vpop.permute.xlu0 %820
        %v823 = vsel %vm766, %v819, 0
        %v826 = vsel %vm766, %v821, 0
        %828 = vmatpush.bf16.xpose.msra.mxu0 0
        %829 = vmatpush.bf16.xpose.msra.mxu0 0
        %830 = vmatpush.bf16.xpose.msra.mxu0 0
        %831 = vmatpush.bf16.xpose.msra.mxu0 0
        %832 = vmatpush.bf16.xpose.msra.mxu0 0
        %833 = vmatpush.bf16.xpose.msra.mxu0 0
        %834 = vmatpush.bf16.xpose.msra.mxu0 0
        %835 = vmatpush.bf16.xpose.msra.mxu0 %v826
        %836 = vmatmul.bf16.gmra.mxu0 %v823
        %v837 = vpop.f32.mrf.mxu0
        %v838 = vadd.f32 0.0, %v837
        %v839 = vpop.f32.mrf.mxu0
        %840 = vdwg.mxu0
        %v841 = vsel %vm377, %v838, -inf
        %842 = vmax.xlane.f32.xlu0 %v841
        %v843 = vpop.xlane.xlu0 %842
        %v844 = vsub.f32 %v838, %v843
        %v845 = vmul.f32 %v844, 1.442695
        %v846 = vpow.pop %v845
        %v847 = vsel %vm377, %v846, 0.0
        %848 = vadd.xlane.f32.xlu0 %v847
        %v849 = vpop.xlane.xlu0 %848
        %v850 = vrcp.pop %v849
        %v851 = vmul.f32 %v846, %v850
        %v852 = vpack.c.bf16 %v851, %v851
        %v854 = vunpack.c.l.b16 %v760
        %v855 = vpack.c.b16 %v854, %v854
        %856 = vrot.lane.b32.xlu0 %v855, 96
        %v857 = vpop.permute.xlu0 %856
        %v859 = vsel %vm377, %v852, 0
        %v862 = vsel %vm801, %v857, 0
        %864 = vmatpush.bf16.msra.mxu0 0
        %865 = vmatpush.bf16.msra.mxu0 0
        %866 = vmatpush.bf16.msra.mxu0 0
        %867 = vmatpush.bf16.msra.mxu0 0
        %868 = vmatpush.bf16.msra.mxu0 0
        %869 = vmatpush.bf16.msra.mxu0 0
        %870 = vmatpush.bf16.msra.mxu0 0
        %871 = vmatpush.bf16.msra.mxu0 %v862
        %872 = vmatmul.bf16.gmra.mxu0 %v859
        %v873 = vpop.f32.mrf.mxu0
        %v874 = vadd.f32 0.0, %v873
        %v875 = vpop.f32.mrf.mxu0
        %876 = vdwg.mxu0
        %878 = vrot.lane.b32.xlu0 %v874, 32
        %v879 = vpop.permute.xlu0 %878
        %v881 = vsel %vm766, %v815, %v879
        %v882 = vpack.c.bf16 %v881, %v881
        %v883 = vld [vmem:[%s3] sm:$0xf]
        %v884 = vld [vmem:[%s3 + $0x4] sm:$0xf]
        %v885 = vld [vmem:[%s3 + $0x8] sm:$0xf]
        %v886 = vld [vmem:[%s3 + $0xc] sm:$0xf]
        %v887 = vld [vmem:[%s3 + $0x10] sm:$0xf]
        %v888 = vld [vmem:[%s3 + $0x14] sm:$0xf]
        %v889 = vld [vmem:[%s3 + $0x18] sm:$0xf]
        %v890 = vld [vmem:[%s3 + $0x1c] sm:$0xf]
        %v891 = vperm.slane %v332, 0
        %v900 = vunpack.c.l.b16 %v883
        %v901 = vunpack.c.l.b16 %v884
        %v902 = vunpack.c.l.b16 %v885
        %v903 = vunpack.c.l.b16 %v886
        %v904 = vunpack.c.l.b16 %v887
        %v905 = vunpack.c.l.b16 %v888
        %v906 = vunpack.c.l.b16 %v889
        %v907 = vunpack.c.l.b16 %v890
        %v908 = vpack.c.b16 %v901, %v900
        %v909 = vpack.c.b16 %v903, %v902
        %v910 = vpack.c.b16 %v905, %v904
        %v911 = vpack.c.b16 %v907, %v906
        %v917 = vsel %vm729, %v882, 0
        %919 = vmatpush.bf16.msra.mxu0 0
        %920 = vmatpush.bf16.msra.mxu0 0
        %921 = vmatpush.bf16.msra.mxu0 0
        %922 = vmatpush.bf16.msra.mxu0 0
        %923 = vmatpush.bf16.msra.mxu0 %v911
        %924 = vmatpush.bf16.msra.mxu0 %v910
        %925 = vmatpush.bf16.msra.mxu0 %v909
        %926 = vmatpush.bf16.msra.mxu0 %v908
        %927 = vmatmul.bf16.gmra.mxu0 %v917
        %v928 = vpop.f32.mrf.mxu0
        %v929 = vadd.f32 %v891, %v928
        %v930 = vpop.f32.mrf.mxu0
        %931 = vdwg.mxu0
        %v932 = vadd.f32 %v671, %v929
        %v933 = vsel %vm729, %v932, 0.0
        %934 = vadd.xlane.f32.xlu0 %v933
        %v935 = vpop.xlane.xlu0 %934
        %v936 = vrcp.pop 64.0
        %v937 = vmul.f32 64.0, %v936
        %v938 = vsub.f32 1.0, %v937
        %v939 = vmul.f32 %v936, %v938
        %v940 = vadd.f32 %v936, %v939
        %vm941 = vweird.f32 %v936
        %v942 = vsel %vm941, %v936, %v940
        %v943 = vmul.f32 %v935, %v942
        %v944 = vsub.f32 %v932, %v943
        %v945 = vmul.f32 %v944, %v944
        %v946 = vsel %vm729, %v945, 0.0
        %947 = vadd.xlane.f32.xlu0 %v946
        %v948 = vpop.xlane.xlu0 %947
        %v949 = vmul.f32 %v948, %v942
        %v950 = vadd.f32 %v949, 1e-05
        %v951 = vrsqrt.pop %v950
        %v952 = vmul.f32 %v951, %v950
        %v953 = vmul.f32 %v952, %v951
        %v954 = vmul.f32 0.5, %v953
        %v955 = vsub.f32 1.5, %v954
        %v956 = vmul.f32 %v951, %v955
        %vm957 = vweird.f32 %v950
        %vm958 = vweird.f32 %v951
        %vm959 = vmor %vm957, %vm958
        %v960 = vsel %vm959, %v951, %v956
        %v961 = vmul.f32 %v944, %v960
        %v962 = vperm.slane %v333, 0
        %v963 = vmul.f32 %v961, %v962
        %v964 = vperm.slane %v334, 0
        %v965 = vadd.f32 %v963, %v964
        %v966 = vpack.c.bf16 %v965, %v965
        %v967 = vld [vmem:[%s4] sm:$0xff]
        %v968 = vld [vmem:[%s4 + $0x8] sm:$0xff]
        %v969 = vld [vmem:[%s4 + $0x40] sm:$0xff]
        %v970 = vld [vmem:[%s4 + $0x48] sm:$0xff]
        %v971 = vld [vmem:[%s4 + $0x80] sm:$0xff]
        %v972 = vld [vmem:[%s4 + $0x88] sm:$0xff]
        %v973 = vld [vmem:[%s4 + $0xc0] sm:$0xff]
        %v974 = vld [vmem:[%s4 + $0xc8] sm:$0xff]
        %v975 = vld [vmem:[%s4 + $0x100] sm:$0xff]
        %v976 = vld [vmem:[%s4 + $0x108] sm:$0xff]
        %v977 = vld [vmem:[%s4 + $0x140] sm:$0xff]
        %v978 = vld [vmem:[%s4 + $0x148] sm:$0xff]
        %v979 = vld [vmem:[%s4 + $0x180] sm:$0xff]
        %v980 = vld [vmem:[%s4 + $0x188] sm:$0xff]
        %v981 = vld [vmem:[%s4 + $0x1c0] sm:$0xff]
        %v982 = vld [vmem:[%s4 + $0x1c8] sm:$0xff]
        %v983 = vld [vmem:[%s8] sm:$0xf]
        %v985 = vperm.slane %v983, 0
        %v986 = vperm.slane %v983, 1
        %v987 = vperm.slane %v983, 2
        %v988 = vperm.slane %v983, 3
        %v1009 = vunpack.c.l.b16 %v967
        %v1010 = vunpack.c.h.b16 %v967
        %v1011 = vunpack.c.l.b16 %v968
        %v1012 = vunpack.c.h.b16 %v968
        %v1013 = vunpack.c.l.b16 %v969
        %v1014 = vunpack.c.h.b16 %v969
        %v1015 = vunpack.c.l.b16 %v970
        %v1016 = vunpack.c.h.b16 %v970
        %v1017 = vunpack.c.l.b16 %v971
        %v1018 = vunpack.c.h.b16 %v971
        %v1019 = vunpack.c.l.b16 %v972
        %v1020 = vunpack.c.h.b16 %v972
        %v1021 = vunpack.c.l.b16 %v973
        %v1022 = vunpack.c.h.b16 %v973
        %v1023 = vunpack.c.l.b16 %v974
        %v1024 = vunpack.c.h.b16 %v974
        %v1025 = vunpack.c.l.b16 %v975
        %v1026 = vunpack.c.h.b16 %v975
        %v1027 = vunpack.c.l.b16 %v976
        %v1028 = vunpack.c.h.b16 %v976
        %v1029 = vunpack.c.l.b16 %v977
        %v1030 = vunpack.c.h.b16 %v977
        %v1031 = vunpack.c.l.b16 %v978
        %v1032 = vunpack.c.h.b16 %v978
        %v1033 = vunpack.c.l.b16 %v979
        %v1034 = vunpack.c.h.b16 %v979
        %v1035 = vunpack.c.l.b16 %v980
        %v1036 = vunpack.c.h.b16 %v980
        %v1037 = vunpack.c.l.b16 %v981
        %v1038 = vunpack.c.h.b16 %v981
        %v1039 = vunpack.c.l.b16 %v982
        %v1040 = vunpack.c.h.b16 %v982
        %v1041 = vpack.c.b16 %v1013, %v1009
        %v1042 = vpack.c.b16 %v1014, %v1010
        %v1043 = vpack.c.b16 %v1015, %v1011
        %v1044 = vpack.c.b16 %v1016, %v1012
        %v1045 = vpack.c.b16 %v1021, %v1017
        %v1046 = vpack.c.b16 %v1022, %v1018
        %v1047 = vpack.c.b16 %v1023, %v1019
        %v1048 = vpack.c.b16 %v1024, %v1020
        %v1049 = vpack.c.b16 %v1029, %v1025
        %v1050 = vpack.c.b16 %v1030, %v1026
        %v1051 = vpack.c.b16 %v1031, %v1027
        %v1052 = vpack.c.b16 %v1032, %v1028
        %v1053 = vpack.c.b16 %v1037, %v1033
        %v1054 = vpack.c.b16 %v1038, %v1034
        %v1055 = vpack.c.b16 %v1039, %v1035
        %v1056 = vpack.c.b16 %v1040, %v1036
        %v1074 = vsel %vm729, %v966, 0
        %1076 = vmatpush.bf16.msra.mxu0 0
        %1077 = vmatpush.bf16.msra.mxu0 0
        %1078 = vmatpush.bf16.msra.mxu0 0
        %1079 = vmatpush.bf16.msra.mxu0 0
        %1080 = vmatpush.bf16.msra.mxu0 %v1053
        %1081 = vmatpush.bf16.msra.mxu0 %v1049
        %1082 = vmatpush.bf16.msra.mxu0 %v1045
        %1083 = vmatpush.bf16.msra.mxu0 %v1041
        %1084 = vmatmul.bf16.gmra.mxu0 %v1074
        %v1085 = vpop.f32.mrf.mxu0
        %v1086 = vadd.f32 %v985, %v1085
        %v1087 = vpop.f32.mrf.mxu0
        %1088 = vdwg.mxu0
        %1089 = vmatpush.bf16.msra.mxu0 0
        %1090 = vmatpush.bf16.msra.mxu0 0
        %1091 = vmatpush.bf16.msra.mxu0 0
        %1092 = vmatpush.bf16.msra.mxu0 0
        %1093 = vmatpush.bf16.msra.mxu0 %v1054
        %1094 = vmatpush.bf16.msra.mxu0 %v1050
        %1095 = vmatpush.bf16.msra.mxu0 %v1046
        %1096 = vmatpush.bf16.msra.mxu0 %v1042
        %1097 = vmatmul.bf16.gmra.mxu0 %v1074
        %v1098 = vpop.f32.mrf.mxu0
        %v1099 = vadd.f32 %v986, %v1098
        %v1100 = vpop.f32.mrf.mxu0
        %1101 = vdwg.mxu0
        %1102 = vmatpush.bf16.msra.mxu0 0
        %1103 = vmatpush.bf16.msra.mxu0 0
        %1104 = vmatpush.bf16.msra.mxu0 0
        %1105 = vmatpush.bf16.msra.mxu0 0
        %1106 = vmatpush.bf16.msra.mxu0 %v1055
        %1107 = vmatpush.bf16.msra.mxu0 %v1051
        %1108 = vmatpush.bf16.msra.mxu0 %v1047
        %1109 = vmatpush.bf16.msra.mxu0 %v1043
        %1110 = vmatmul.bf16.gmra.mxu0 %v1074
        %v1111 = vpop.f32.mrf.mxu0
        %v1112 = vadd.f32 %v987, %v1111
        %v1113 = vpop.f32.mrf.mxu0
        %1114 = vdwg.mxu0
        %1115 = vmatpush.bf16.msra.mxu0 0
        %1116 = vmatpush.bf16.msra.mxu0 0
        %1117 = vmatpush.bf16.msra.mxu0 0
        %1118 = vmatpush.bf16.msra.mxu0 0
        %1119 = vmatpush.bf16.msra.mxu0 %v1056
        %1120 = vmatpush.bf16.msra.mxu0 %v1052
        %1121 = vmatpush.bf16.msra.mxu0 %v1048
        %1122 = vmatpush.bf16.msra.mxu0 %v1044
        %1123 = vmatmul.bf16.gmra.mxu0 %v1074
        %v1124 = vpop.f32.mrf.mxu0
        %v1125 = vadd.f32 %v988, %v1124
        %v1126 = vpop.f32.mrf.mxu0
        %1127 = vdwg.mxu0
        %v1128 = vmax.f32 %v1086, 0.0
        %v1129 = vmax.f32 %v1099, 0.0
        %v1130 = vmax.f32 %v1112, 0.0
        %v1131 = vmax.f32 %v1125, 0.0
        %v1132 = vpack.c.bf16 %v1128, %v1128
        %v1133 = vpack.c.bf16 %v1129, %v1129
        %v1134 = vpack.c.bf16 %v1130, %v1130
        %v1135 = vpack.c.bf16 %v1131, %v1131
        %v1136 = vld [vmem:[%s5] sm:$0xf]
        %v1137 = vld [vmem:[%s5 + $0x4] sm:$0xf]
        %v1138 = vld [vmem:[%s5 + $0x8] sm:$0xf]
        %v1139 = vld [vmem:[%s5 + $0xc] sm:$0xf]
        %v1140 = vld [vmem:[%s5 + $0x10] sm:$0xf]
        %v1141 = vld [vmem:[%s5 + $0x14] sm:$0xf]
        %v1142 = vld [vmem:[%s5 + $0x18] sm:$0xf]
        %v1143 = vld [vmem:[%s5 + $0x1c] sm:$0xf]
        %v1144 = vld [vmem:[%s5 + $0x20] sm:$0xf]
        %v1145 = vld [vmem:[%s5 + $0x24] sm:$0xf]
        %v1146 = vld [vmem:[%s5 + $0x28] sm:$0xf]
        %v1147 = vld [vmem:[%s5 + $0x2c] sm:$0xf]
        %v1148 = vld [vmem:[%s5 + $0x30] sm:$0xf]
        %v1149 = vld [vmem:[%s5 + $0x34] sm:$0xf]
        %v1150 = vld [vmem:[%s5 + $0x38] sm:$0xf]
        %v1151 = vld [vmem:[%s5 + $0x3c] sm:$0xf]
        %v1152 = vld [vmem:[%s5 + $0x40] sm:$0xf]
        %v1153 = vld [vmem:[%s5 + $0x44] sm:$0xf]
        %v1154 = vld [vmem:[%s5 + $0x48] sm:$0xf]
        %v1155 = vld [vmem:[%s5 + $0x4c] sm:$0xf]
        %v1156 = vld [vmem:[%s5 + $0x50] sm:$0xf]
        %v1157 = vld [vmem:[%s5 + $0x54] sm:$0xf]
        %v1158 = vld [vmem:[%s5 + $0x58] sm:$0xf]
        %v1159 = vld [vmem:[%s5 + $0x5c] sm:$0xf]
        %v1160 = vld [vmem:[%s5 + $0x60] sm:$0xf]
        %v1161 = vld [vmem:[%s5 + $0x64] sm:$0xf]
        %v1162 = vld [vmem:[%s5 + $0x68] sm:$0xf]
        %v1163 = vld [vmem:[%s5 + $0x6c] sm:$0xf]
        %v1164 = vld [vmem:[%s5 + $0x70] sm:$0xf]
        %v1165 = vld [vmem:[%s5 + $0x74] sm:$0xf]
        %v1166 = vld [vmem:[%s5 + $0x78] sm:$0xf]
        %v1167 = vld [vmem:[%s5 + $0x7c] sm:$0xf]
        %v1168 = vld [vmem:[%s5 + $0x80] sm:$0xf]
        %v1169 = vld [vmem:[%s5 + $0x84] sm:$0xf]
        %v1170 = vld [vmem:[%s5 + $0x88] sm:$0xf]
        %v1171 = vld [vmem:[%s5 + $0x8c] sm:$0xf]
        %v1172 = vld [vmem:[%s5 + $0x90] sm:$0xf]
        %v1173 = vld [vmem:[%s5 + $0x94] sm:$0xf]
        %v1174 = vld [vmem:[%s5 + $0x98] sm:$0xf]
        %v1175 = vld [vmem:[%s5 + $0x9c] sm:$0xf]
        %v1176 = vld [vmem:[%s5 + $0xa0] sm:$0xf]
        %v1177 = vld [vmem:[%s5 + $0xa4] sm:$0xf]
        %v1178 = vld [vmem:[%s5 + $0xa8] sm:$0xf]
        %v1179 = vld [vmem:[%s5 + $0xac] sm:$0xf]
        %v1180 = vld [vmem:[%s5 + $0xb0] sm:$0xf]
        %v1181 = vld [vmem:[%s5 + $0xb4] sm:$0xf]
        %v1182 = vld [vmem:[%s5 + $0xb8] sm:$0xf]
        %v1183 = vld [vmem:[%s5 + $0xbc] sm:$0xf]
        %v1184 = vld [vmem:[%s5 + $0xc0] sm:$0xf]
        %v1185 = vld [vmem:[%s5 + $0xc4] sm:$0xf]
        %v1186 = vld [vmem:[%s5 + $0xc8] sm:$0xf]
        %v1187 = vld [vmem:[%s5 + $0xcc] sm:$0xf]
        %v1188 = vld [vmem:[%s5 + $0xd0] sm:$0xf]
        %v1189 = vld [vmem:[%s5 + $0xd4] sm:$0xf]
        %v1190 = vld [vmem:[%s5 + $0xd8] sm:$0xf]
        %v1191 = vld [vmem:[%s5 + $0xdc] sm:$0xf]
        %v1192 = vld [vmem:[%s5 + $0xe0] sm:$0xf]
        %v1193 = vld [vmem:[%s5 + $0xe4] sm:$0xf]
        %v1194 = vld [vmem:[%s5 + $0xe8] sm:$0xf]
        %v1195 = vld [vmem:[%s5 + $0xec] sm:$0xf]
        %v1196 = vld [vmem:[%s5 + $0xf0] sm:$0xf]
        %v1197 = vld [vmem:[%s5 + $0xf4] sm:$0xf]
        %v1198 = vld [vmem:[%s5 + $0xf8] sm:$0xf]
        %v1199 = vld [vmem:[%s5 + $0xfc] sm:$0xf]
        %v1200 = vld [vmem:[%s4 + $0x10] sm:$0xff]
        %v1201 = vld [vmem:[%s4 + $0x18] sm:$0xff]
        %v1202 = vld [vmem:[%s4 + $0x50] sm:$0xff]
        %v1203 = vld [vmem:[%s4 + $0x58] sm:$0xff]
        %v1204 = vld [vmem:[%s4 + $0x90] sm:$0xff]
        %v1205 = vld [vmem:[%s4 + $0x98] sm:$0xff]
        %v1206 = vld [vmem:[%s4 + $0xd0] sm:$0xff]
        %v1207 = vld [vmem:[%s4 + $0xd8] sm:$0xff]
        %v1208 = vld [vmem:[%s4 + $0x110] sm:$0xff]
        %v1209 = vld [vmem:[%s4 + $0x118] sm:$0xff]
        %v1210 = vld [vmem:[%s4 + $0x150] sm:$0xff]
        %v1211 = vld [vmem:[%s4 + $0x158] sm:$0xff]
        %v1212 = vld [vmem:[%s4 + $0x190] sm:$0xff]
        %v1213 = vld [vmem:[%s4 + $0x198] sm:$0xff]
        %v1214 = vld [vmem:[%s4 + $0x1d0] sm:$0xff]
        %v1215 = vld [vmem:[%s4 + $0x1d8] sm:$0xff]
        %v1216 = vld [vmem:[%s8 + $0x4] sm:$0xf]
        %v1218 = vperm.slane %v1216, 0
        %v1219 = vperm.slane %v1216, 1
        %v1220 = vperm.slane %v1216, 2
        %v1221 = vperm.slane %v1216, 3
        %v1242 = vunpack.c.l.b16 %v1200
        %v1243 = vunpack.c.h.b16 %v1200
        %v1244 = vunpack.c.l.b16 %v1201
        %v1245 = vunpack.c.h.b16 %v1201
        %v1246 = vunpack.c.l.b16 %v1202
        %v1247 = vunpack.c.h.b16 %v1202
        %v1248 = vunpack.c.l.b16 %v1203
        %v1249 = vunpack.c.h.b16 %v1203
        %v1250 = vunpack.c.l.b16 %v1204
        %v1251 = vunpack.c.h.b16 %v1204
        %v1252 = vunpack.c.l.b16 %v1205
        %v1253 = vunpack.c.h.b16 %v1205
        %v1254 = vunpack.c.l.b16 %v1206
        %v1255 = vunpack.c.h.b16 %v1206
        %v1256 = vunpack.c.l.b16 %v1207
        %v1257 = vunpack.c.h.b16 %v1207
        %v1258 = vunpack.c.l.b16 %v1208
        %v1259 = vunpack.c.h.b16 %v1208
        %v1260 = vunpack.c.l.b16 %v1209
        %v1261 = vunpack.c.h.b16 %v1209
        %v1262 = vunpack.c.l.b16 %v1210
        %v1263 = vunpack.c.h.b16 %v1210
        %v1264 = vunpack.c.l.b16 %v1211
        %v1265 = vunpack.c.h.b16 %v1211
        %v1266 = vunpack.c.l.b16 %v1212
        %v1267 = vunpack.c.h.b16 %v1212
        %v1268 = vunpack.c.l.b16 %v1213
        %v1269 = vunpack.c.h.b16 %v1213
        %v1270 = vunpack.c.l.b16 %v1214
        %v1271 = vunpack.c.h.b16 %v1214
        %v1272 = vunpack.c.l.b16 %v1215
        %v1273 = vunpack.c.h.b16 %v1215
        %v1274 = vpack.c.b16 %v1246, %v1242
        %v1275 = vpack.c.b16 %v1247, %v1243
        %v1276 = vpack.c.b16 %v1248, %v1244
        %v1277 = vpack.c.b16 %v1249, %v1245
        %v1278 = vpack.c.b16 %v1254, %v1250
        %v1279 = vpack.c.b16 %v1255, %v1251
        %v1280 = vpack.c.b16 %v1256, %v1252
        %v1281 = vpack.c.b16 %v1257, %v1253
        %v1282 = vpack.c.b16 %v1262, %v1258
        %v1283 = vpack.c.b16 %v1263, %v1259
        %v1284 = vpack.c.b16 %v1264, %v1260
        %v1285 = vpack.c.b16 %v1265, %v1261
        %v1286 = vpack.c.b16 %v1270, %v1266
        %v1287 = vpack.c.b16 %v1271, %v1267
        %v1288 = vpack.c.b16 %v1272, %v1268
        %v1289 = vpack.c.b16 %v1273, %v1269
        %1306 = vmatpush.bf16.msra.mxu0 0
        %1307 = vmatpush.bf16.msra.mxu0 0
        %1308 = vmatpush.bf16.msra.mxu0 0
        %1309 = vmatpush.bf16.msra.mxu0 0
        %1310 = vmatpush.bf16.msra.mxu0 %v1286
        %1311 = vmatpush.bf16.msra.mxu0 %v1282
        %1312 = vmatpush.bf16.msra.mxu0 %v1278
        %1313 = vmatpush.bf16.msra.mxu0 %v1274
        %1314 = vmatmul.bf16.gmra.mxu0 %v1074
        %v1315 = vpop.f32.mrf.mxu0
        %v1316 = vadd.f32 %v1218, %v1315
        %v1317 = vpop.f32.mrf.mxu0
        %1318 = vdwg.mxu0
        %1319 = vmatpush.bf16.msra.mxu0 0
        %1320 = vmatpush.bf16.msra.mxu0 0
        %1321 = vmatpush.bf16.msra.mxu0 0
        %1322 = vmatpush.bf16.msra.mxu0 0
        %1323 = vmatpush.bf16.msra.mxu0 %v1287
        %1324 = vmatpush.bf16.msra.mxu0 %v1283
        %1325 = vmatpush.bf16.msra.mxu0 %v1279
        %1326 = vmatpush.bf16.msra.mxu0 %v1275
        %1327 = vmatmul.bf16.gmra.mxu0 %v1074
        %v1328 = vpop.f32.mrf.mxu0
        %v1329 = vadd.f32 %v1219, %v1328
        %v1330 = vpop.f32.mrf.mxu0
        %1331 = vdwg.mxu0
        %1332 = vmatpush.bf16.msra.mxu0 0
        %1333 = vmatpush.bf16.msra.mxu0 0
        %1334 = vmatpush.bf16.msra.mxu0 0
        %1335 = vmatpush.bf16.msra.mxu0 0
        %1336 = vmatpush.bf16.msra.mxu0 %v1288
        %1337 = vmatpush.bf16.msra.mxu0 %v1284
        %1338 = vmatpush.bf16.msra.mxu0 %v1280
        %1339 = vmatpush.bf16.msra.mxu0 %v1276
        %1340 = vmatmul.bf16.gmra.mxu0 %v1074
        %v1341 = vpop.f32.mrf.mxu0
        %v1342 = vadd.f32 %v1220, %v1341
        %v1343 = vpop.f32.mrf.mxu0
        %1344 = vdwg.mxu0
        %1345 = vmatpush.bf16.msra.mxu0 0
        %1346 = vmatpush.bf16.msra.mxu0 0
        %1347 = vmatpush.bf16.msra.mxu0 0
        %1348 = vmatpush.bf16.msra.mxu0 0
        %1349 = vmatpush.bf16.msra.mxu0 %v1289
        %1350 = vmatpush.bf16.msra.mxu0 %v1285
        %1351 = vmatpush.bf16.msra.mxu0 %v1281
        %1352 = vmatpush.bf16.msra.mxu0 %v1277
        %1353 = vmatmul.bf16.gmra.mxu0 %v1074
        %v1354 = vpop.f32.mrf.mxu0
        %v1355 = vadd.f32 %v1221, %v1354
        %v1356 = vpop.f32.mrf.mxu0
        %1357 = vdwg.mxu0
        %v1358 = vmax.f32 %v1316, 0.0
        %v1359 = vmax.f32 %v1329, 0.0
        %v1360 = vmax.f32 %v1342, 0.0
        %v1361 = vmax.f32 %v1355, 0.0
        %v1362 = vpack.c.bf16 %v1358, %v1358
        %v1363 = vpack.c.bf16 %v1359, %v1359
        %v1364 = vpack.c.bf16 %v1360, %v1360
        %v1365 = vpack.c.bf16 %v1361, %v1361
        %v1366 = vld [vmem:[%s5 + $0x100] sm:$0xf]
        %v1367 = vld [vmem:[%s5 + $0x104] sm:$0xf]
        %v1368 = vld [vmem:[%s5 + $0x108] sm:$0xf]
        %v1369 = vld [vmem:[%s5 + $0x10c] sm:$0xf]
        %v1370 = vld [vmem:[%s5 + $0x110] sm:$0xf]
        %v1371 = vld [vmem:[%s5 + $0x114] sm:$0xf]
        %v1372 = vld [vmem:[%s5 + $0x118] sm:$0xf]
        %v1373 = vld [vmem:[%s5 + $0x11c] sm:$0xf]
        %v1374 = vld [vmem:[%s5 + $0x120] sm:$0xf]
        %v1375 = vld [vmem:[%s5 + $0x124] sm:$0xf]
        %v1376 = vld [vmem:[%s5 + $0x128] sm:$0xf]
        %v1377 = vld [vmem:[%s5 + $0x12c] sm:$0xf]
        %v1378 = vld [vmem:[%s5 + $0x130] sm:$0xf]
        %v1379 = vld [vmem:[%s5 + $0x134] sm:$0xf]
        %v1380 = vld [vmem:[%s5 + $0x138] sm:$0xf]
        %v1381 = vld [vmem:[%s5 + $0x13c] sm:$0xf]
        %v1382 = vld [vmem:[%s5 + $0x140] sm:$0xf]
        %v1383 = vld [vmem:[%s5 + $0x144] sm:$0xf]
        %v1384 = vld [vmem:[%s5 + $0x148] sm:$0xf]
        %v1385 = vld [vmem:[%s5 + $0x14c] sm:$0xf]
        %v1386 = vld [vmem:[%s5 + $0x150] sm:$0xf]
        %v1387 = vld [vmem:[%s5 + $0x154] sm:$0xf]
        %v1388 = vld [vmem:[%s5 + $0x158] sm:$0xf]
        %v1389 = vld [vmem:[%s5 + $0x15c] sm:$0xf]
        %v1390 = vld [vmem:[%s5 + $0x160] sm:$0xf]
        %v1391 = vld [vmem:[%s5 + $0x164] sm:$0xf]
        %v1392 = vld [vmem:[%s5 + $0x168] sm:$0xf]
        %v1393 = vld [vmem:[%s5 + $0x16c] sm:$0xf]
        %v1394 = vld [vmem:[%s5 + $0x170] sm:$0xf]
        %v1395 = vld [vmem:[%s5 + $0x174] sm:$0xf]
        %v1396 = vld [vmem:[%s5 + $0x178] sm:$0xf]
        %v1397 = vld [vmem:[%s5 + $0x17c] sm:$0xf]
        %v1398 = vld [vmem:[%s5 + $0x180] sm:$0xf]
        %v1399 = vld [vmem:[%s5 + $0x184] sm:$0xf]
        %v1400 = vld [vmem:[%s5 + $0x188] sm:$0xf]
        %v1401 = vld [vmem:[%s5 + $0x18c] sm:$0xf]
        %v1402 = vld [vmem:[%s5 + $0x190] sm:$0xf]
        %v1403 = vld [vmem:[%s5 + $0x194] sm:$0xf]
        %v1404 = vld [vmem:[%s5 + $0x198] sm:$0xf]
        %v1405 = vld [vmem:[%s5 + $0x19c] sm:$0xf]
        %v1406 = vld [vmem:[%s5 + $0x1a0] sm:$0xf]
        %v1407 = vld [vmem:[%s5 + $0x1a4] sm:$0xf]
        %v1408 = vld [vmem:[%s5 + $0x1a8] sm:$0xf]
        %v1409 = vld [vmem:[%s5 + $0x1ac] sm:$0xf]
        %v1410 = vld [vmem:[%s5 + $0x1b0] sm:$0xf]
        %v1411 = vld [vmem:[%s5 + $0x1b4] sm:$0xf]
        %v1412 = vld [vmem:[%s5 + $0x1b8] sm:$0xf]
        %v1413 = vld [vmem:[%s5 + $0x1bc] sm:$0xf]
        %v1414 = vld [vmem:[%s5 + $0x1c0] sm:$0xf]
        %v1415 = vld [vmem:[%s5 + $0x1c4] sm:$0xf]
        %v1416 = vld [vmem:[%s5 + $0x1c8] sm:$0xf]
        %v1417 = vld [vmem:[%s5 + $0x1cc] sm:$0xf]
        %v1418 = vld [vmem:[%s5 + $0x1d0] sm:$0xf]
        %v1419 = vld [vmem:[%s5 + $0x1d4] sm:$0xf]
        %v1420 = vld [vmem:[%s5 + $0x1d8] sm:$0xf]
        %v1421 = vld [vmem:[%s5 + $0x1dc] sm:$0xf]
        %v1422 = vld [vmem:[%s5 + $0x1e0] sm:$0xf]
        %v1423 = vld [vmem:[%s5 + $0x1e4] sm:$0xf]
        %v1424 = vld [vmem:[%s5 + $0x1e8] sm:$0xf]
        %v1425 = vld [vmem:[%s5 + $0x1ec] sm:$0xf]
        %v1426 = vld [vmem:[%s5 + $0x1f0] sm:$0xf]
        %v1427 = vld [vmem:[%s5 + $0x1f4] sm:$0xf]
        %v1428 = vld [vmem:[%s5 + $0x1f8] sm:$0xf]
        %v1429 = vld [vmem:[%s5 + $0x1fc] sm:$0xf]
        %v1494 = vunpack.c.l.b16 %v1366
        %v1495 = vunpack.c.l.b16 %v1367
        %v1496 = vunpack.c.l.b16 %v1368
        %v1497 = vunpack.c.l.b16 %v1369
        %v1498 = vunpack.c.l.b16 %v1370
        %v1499 = vunpack.c.l.b16 %v1371
        %v1500 = vunpack.c.l.b16 %v1372
        %v1501 = vunpack.c.l.b16 %v1373
        %v1502 = vunpack.c.l.b16 %v1374
        %v1503 = vunpack.c.l.b16 %v1375
        %v1504 = vunpack.c.l.b16 %v1376
        %v1505 = vunpack.c.l.b16 %v1377
        %v1506 = vunpack.c.l.b16 %v1378
        %v1507 = vunpack.c.l.b16 %v1379
        %v1508 = vunpack.c.l.b16 %v1380
        %v1509 = vunpack.c.l.b16 %v1381
        %v1510 = vunpack.c.l.b16 %v1382
        %v1511 = vunpack.c.l.b16 %v1383
        %v1512 = vunpack.c.l.b16 %v1384
        %v1513 = vunpack.c.l.b16 %v1385
        %v1514 = vunpack.c.l.b16 %v1386
        %v1515 = vunpack.c.l.b16 %v1387
        %v1516 = vunpack.c.l.b16 %v1388
        %v1517 = vunpack.c.l.b16 %v1389
        %v1518 = vunpack.c.l.b16 %v1390
        %v1519 = vunpack.c.l.b16 %v1391
        %v1520 = vunpack.c.l.b16 %v1392
        %v1521 = vunpack.c.l.b16 %v1393
        %v1522 = vunpack.c.l.b16 %v1394
        %v1523 = vunpack.c.l.b16 %v1395
        %v1524 = vunpack.c.l.b16 %v1396
        %v1525 = vunpack.c.l.b16 %v1397
        %v1526 = vunpack.c.l.b16 %v1398
        %v1527 = vunpack.c.l.b16 %v1399
        %v1528 = vunpack.c.l.b16 %v1400
        %v1529 = vunpack.c.l.b16 %v1401
        %v1530 = vunpack.c.l.b16 %v1402
        %v1531 = vunpack.c.l.b16 %v1403
        %v1532 = vunpack.c.l.b16 %v1404
        %v1533 = vunpack.c.l.b16 %v1405
        %v1534 = vunpack.c.l.b16 %v1406
        %v1535 = vunpack.c.l.b16 %v1407
        %v1536 = vunpack.c.l.b16 %v1408
        %v1537 = vunpack.c.l.b16 %v1409
        %v1538 = vunpack.c.l.b16 %v1410
        %v1539 = vunpack.c.l.b16 %v1411
        %v1540 = vunpack.c.l.b16 %v1412
        %v1541 = vunpack.c.l.b16 %v1413
        %v1542 = vunpack.c.l.b16 %v1414
        %v1543 = vunpack.c.l.b16 %v1415
        %v1544 = vunpack.c.l.b16 %v1416
        %v1545 = vunpack.c.l.b16 %v1417
        %v1546 = vunpack.c.l.b16 %v1418
        %v1547 = vunpack.c.l.b16 %v1419
        %v1548 = vunpack.c.l.b16 %v1420
        %v1549 = vunpack.c.l.b16 %v1421
        %v1550 = vunpack.c.l.b16 %v1422
        %v1551 = vunpack.c.l.b16 %v1423
        %v1552 = vunpack.c.l.b16 %v1424
        %v1553 = vunpack.c.l.b16 %v1425
        %v1554 = vunpack.c.l.b16 %v1426
        %v1555 = vunpack.c.l.b16 %v1427
        %v1556 = vunpack.c.l.b16 %v1428
        %v1557 = vunpack.c.l.b16 %v1429
        %v1558 = vpack.c.b16 %v1495, %v1494
        %v1559 = vpack.c.b16 %v1497, %v1496
        %v1560 = vpack.c.b16 %v1499, %v1498
        %v1561 = vpack.c.b16 %v1501, %v1500
        %v1562 = vpack.c.b16 %v1503, %v1502
        %v1563 = vpack.c.b16 %v1505, %v1504
        %v1564 = vpack.c.b16 %v1507, %v1506
        %v1565 = vpack.c.b16 %v1509, %v1508
        %v1566 = vpack.c.b16 %v1511, %v1510
        %v1567 = vpack.c.b16 %v1513, %v1512
        %v1568 = vpack.c.b16 %v1515, %v1514
        %v1569 = vpack.c.b16 %v1517, %v1516
        %v1570 = vpack.c.b16 %v1519, %v1518
        %v1571 = vpack.c.b16 %v1521, %v1520
        %v1572 = vpack.c.b16 %v1523, %v1522
        %v1573 = vpack.c.b16 %v1525, %v1524
        %v1574 = vpack.c.b16 %v1527, %v1526
        %v1575 = vpack.c.b16 %v1529, %v1528
        %v1576 = vpack.c.b16 %v1531, %v1530
        %v1577 = vpack.c.b16 %v1533, %v1532
        %v1578 = vpack.c.b16 %v1535, %v1534
        %v1579 = vpack.c.b16 %v1537, %v1536
        %v1580 = vpack.c.b16 %v1539, %v1538
        %v1581 = vpack.c.b16 %v1541, %v1540
        %v1582 = vpack.c.b16 %v1543, %v1542
        %v1583 = vpack.c.b16 %v1545, %v1544
        %v1584 = vpack.c.b16 %v1547, %v1546
        %v1585 = vpack.c.b16 %v1549, %v1548
        %v1586 = vpack.c.b16 %v1551, %v1550
        %v1587 = vpack.c.b16 %v1553, %v1552
        %v1588 = vpack.c.b16 %v1555, %v1554
        %v1589 = vpack.c.b16 %v1557, %v1556
        %1622 = vmatpush.bf16.msra.mxu0 %v1565
        %1623 = vmatpush.bf16.msra.mxu0 %v1564
        %1624 = vmatpush.bf16.msra.mxu0 %v1563
        %1625 = vmatpush.bf16.msra.mxu0 %v1562
        %1626 = vmatpush.bf16.msra.mxu0 %v1561
        %1627 = vmatpush.bf16.msra.mxu0 %v1560
        %1628 = vmatpush.bf16.msra.mxu0 %v1559
        %1629 = vmatpush.bf16.msra.mxu0 %v1558
        %1630 = vmatmul.bf16.gmra.mxu0 %v1362
        %v1631 = vpop.f32.mrf.mxu0
        %v1632 = vadd.f32 0.0, %v1631
        %v1633 = vpop.f32.mrf.mxu0
        %1634 = vdwg.mxu0
        %1635 = vmatpush.bf16.msra.mxu0 %v1573
        %1636 = vmatpush.bf16.msra.mxu0 %v1572
        %1637 = vmatpush.bf16.msra.mxu0 %v1571
        %1638 = vmatpush.bf16.msra.mxu0 %v1570
        %1639 = vmatpush.bf16.msra.mxu0 %v1569
        %1640 = vmatpush.bf16.msra.mxu0 %v1568
        %1641 = vmatpush.bf16.msra.mxu0 %v1567
        %1642 = vmatpush.bf16.msra.mxu0 %v1566
        %1643 = vmatmul.bf16.gmra.mxu0 %v1363
        %v1644 = vpop.f32.mrf.mxu0
        %v1645 = vadd.f32 %v1632, %v1644
        %v1646 = vpop.f32.mrf.mxu0
        %1647 = vdwg.mxu0
        %1648 = vmatpush.bf16.msra.mxu0 %v1581
        %1649 = vmatpush.bf16.msra.mxu0 %v1580
        %1650 = vmatpush.bf16.msra.mxu0 %v1579
        %1651 = vmatpush.bf16.msra.mxu0 %v1578
        %1652 = vmatpush.bf16.msra.mxu0 %v1577
        %1653 = vmatpush.bf16.msra.mxu0 %v1576
        %1654 = vmatpush.bf16.msra.mxu0 %v1575
        %1655 = vmatpush.bf16.msra.mxu0 %v1574
        %1656 = vmatmul.bf16.gmra.mxu0 %v1364
        %v1657 = vpop.f32.mrf.mxu0
        %v1658 = vadd.f32 %v1645, %v1657
        %v1659 = vpop.f32.mrf.mxu0
        %1660 = vdwg.mxu0
        %1661 = vmatpush.bf16.msra.mxu0 %v1589
        %1662 = vmatpush.bf16.msra.mxu0 %v1588
        %1663 = vmatpush.bf16.msra.mxu0 %v1587
        %1664 = vmatpush.bf16.msra.mxu0 %v1586
        %1665 = vmatpush.bf16.msra.mxu0 %v1585
        %1666 = vmatpush.bf16.msra.mxu0 %v1584
        %1667 = vmatpush.bf16.msra.mxu0 %v1583
        %1668 = vmatpush.bf16.msra.mxu0 %v1582
        %1669 = vmatmul.bf16.gmra.mxu0 %v1365
        %v1670 = vpop.f32.mrf.mxu0
        %v1671 = vadd.f32 %v1658, %v1670
        %v1672 = vpop.f32.mrf.mxu0
        %1673 = vdwg.mxu0
        %v1738 = vunpack.c.l.b16 %v1136
        %v1739 = vunpack.c.l.b16 %v1137
        %v1740 = vunpack.c.l.b16 %v1138
        %v1741 = vunpack.c.l.b16 %v1139
        %v1742 = vunpack.c.l.b16 %v1140
        %v1743 = vunpack.c.l.b16 %v1141
        %v1744 = vunpack.c.l.b16 %v1142
        %v1745 = vunpack.c.l.b16 %v1143
        %v1746 = vunpack.c.l.b16 %v1144
        %v1747 = vunpack.c.l.b16 %v1145
        %v1748 = vunpack.c.l.b16 %v1146
        %v1749 = vunpack.c.l.b16 %v1147
        %v1750 = vunpack.c.l.b16 %v1148
        %v1751 = vunpack.c.l.b16 %v1149
        %v1752 = vunpack.c.l.b16 %v1150
        %v1753 = vunpack.c.l.b16 %v1151
        %v1754 = vunpack.c.l.b16 %v1152
        %v1755 = vunpack.c.l.b16 %v1153
        %v1756 = vunpack.c.l.b16 %v1154
        %v1757 = vunpack.c.l.b16 %v1155
        %v1758 = vunpack.c.l.b16 %v1156
        %v1759 = vunpack.c.l.b16 %v1157
        %v1760 = vunpack.c.l.b16 %v1158
        %v1761 = vunpack.c.l.b16 %v1159
        %v1762 = vunpack.c.l.b16 %v1160
        %v1763 = vunpack.c.l.b16 %v1161
        %v1764 = vunpack.c.l.b16 %v1162
        %v1765 = vunpack.c.l.b16 %v1163
        %v1766 = vunpack.c.l.b16 %v1164
        %v1767 = vunpack.c.l.b16 %v1165
        %v1768 = vunpack.c.l.b16 %v1166
        %v1769 = vunpack.c.l.b16 %v1167
        %v1770 = vunpack.c.l.b16 %v1168
        %v1771 = vunpack.c.l.b16 %v1169
        %v1772 = vunpack.c.l.b16 %v1170
        %v1773 = vunpack.c.l.b16 %v1171
        %v1774 = vunpack.c.l.b16 %v1172
        %v1775 = vunpack.c.l.b16 %v1173
        %v1776 = vunpack.c.l.b16 %v1174
        %v1777 = vunpack.c.l.b16 %v1175
        %v1778 = vunpack.c.l.b16 %v1176
        %v1779 = vunpack.c.l.b16 %v1177
        %v1780 = vunpack.c.l.b16 %v1178
        %v1781 = vunpack.c.l.b16 %v1179
        %v1782 = vunpack.c.l.b16 %v1180
        %v1783 = vunpack.c.l.b16 %v1181
        %v1784 = vunpack.c.l.b16 %v1182
        %v1785 = vunpack.c.l.b16 %v1183
        %v1786 = vunpack.c.l.b16 %v1184
        %v1787 = vunpack.c.l.b16 %v1185
        %v1788 = vunpack.c.l.b16 %v1186
        %v1789 = vunpack.c.l.b16 %v1187
        %v1790 = vunpack.c.l.b16 %v1188
        %v1791 = vunpack.c.l.b16 %v1189
        %v1792 = vunpack.c.l.b16 %v1190
        %v1793 = vunpack.c.l.b16 %v1191
        %v1794 = vunpack.c.l.b16 %v1192
        %v1795 = vunpack.c.l.b16 %v1193
        %v1796 = vunpack.c.l.b16 %v1194
        %v1797 = vunpack.c.l.b16 %v1195
        %v1798 = vunpack.c.l.b16 %v1196
        %v1799 = vunpack.c.l.b16 %v1197
        %v1800 = vunpack.c.l.b16 %v1198
        %v1801 = vunpack.c.l.b16 %v1199
        %v1802 = vpack.c.b16 %v1739, %v1738
        %v1803 = vpack.c.b16 %v1741, %v1740
        %v1804 = vpack.c.b16 %v1743, %v1742
        %v1805 = vpack.c.b16 %v1745, %v1744
        %v1806 = vpack.c.b16 %v1747, %v1746
        %v1807 = vpack.c.b16 %v1749, %v1748
        %v1808 = vpack.c.b16 %v1751, %v1750
        %v1809 = vpack.c.b16 %v1753, %v1752
        %v1810 = vpack.c.b16 %v1755, %v1754
        %v1811 = vpack.c.b16 %v1757, %v1756
        %v1812 = vpack.c.b16 %v1759, %v1758
        %v1813 = vpack.c.b16 %v1761, %v1760
        %v1814 = vpack.c.b16 %v1763, %v1762
        %v1815 = vpack.c.b16 %v1765, %v1764
        %v1816 = vpack.c.b16 %v1767, %v1766
        %v1817 = vpack.c.b16 %v1769, %v1768
        %v1818 = vpack.c.b16 %v1771, %v1770
        %v1819 = vpack.c.b16 %v1773, %v1772
        %v1820 = vpack.c.b16 %v1775, %v1774
        %v1821 = vpack.c.b16 %v1777, %v1776
        %v1822 = vpack.c.b16 %v1779, %v1778
        %v1823 = vpack.c.b16 %v1781, %v1780
        %v1824 = vpack.c.b16 %v1783, %v1782
        %v1825 = vpack.c.b16 %v1785, %v1784
        %v1826 = vpack.c.b16 %v1787, %v1786
        %v1827 = vpack.c.b16 %v1789, %v1788
        %v1828 = vpack.c.b16 %v1791, %v1790
        %v1829 = vpack.c.b16 %v1793, %v1792
        %v1830 = vpack.c.b16 %v1795, %v1794
        %v1831 = vpack.c.b16 %v1797, %v1796
        %v1832 = vpack.c.b16 %v1799, %v1798
        %v1833 = vpack.c.b16 %v1801, %v1800
        %1866 = vmatpush.bf16.msra.mxu0 %v1809
        %1867 = vmatpush.bf16.msra.mxu0 %v1808
        %1868 = vmatpush.bf16.msra.mxu0 %v1807
        %1869 = vmatpush.bf16.msra.mxu0 %v1806
        %1870 = vmatpush.bf16.msra.mxu0 %v1805
        %1871 = vmatpush.bf16.msra.mxu0 %v1804
        %1872 = vmatpush.bf16.msra.mxu0 %v1803
        %1873 = vmatpush.bf16.msra.mxu0 %v1802
        %1874 = vmatmul.bf16.gmra.mxu0 %v1132
        %v1875 = vpop.f32.mrf.mxu0
        %v1876 = vadd.f32 %v1671, %v1875
        %v1877 = vpop.f32.mrf.mxu0
        %1878 = vdwg.mxu0
        %1879 = vmatpush.bf16.msra.mxu0 %v1817
        %1880 = vmatpush.bf16.msra.mxu0 %v1816
        %1881 = vmatpush.bf16.msra.mxu0 %v1815
        %1882 = vmatpush.bf16.msra.mxu0 %v1814
        %1883 = vmatpush.bf16.msra.mxu0 %v1813
        %1884 = vmatpush.bf16.msra.mxu0 %v1812
        %1885 = vmatpush.bf16.msra.mxu0 %v1811
        %1886 = vmatpush.bf16.msra.mxu0 %v1810
        %1887 = vmatmul.bf16.gmra.mxu0 %v1133
        %v1888 = vpop.f32.mrf.mxu0
        %v1889 = vadd.f32 %v1876, %v1888
        %v1890 = vpop.f32.mrf.mxu0
        %1891 = vdwg.mxu0
        %1892 = vmatpush.bf16.msra.mxu0 %v1825
        %1893 = vmatpush.bf16.msra.mxu0 %v1824
        %1894 = vmatpush.bf16.msra.mxu0 %v1823
        %1895 = vmatpush.bf16.msra.mxu0 %v1822
        %1896 = vmatpush.bf16.msra.mxu0 %v1821
        %1897 = vmatpush.bf16.msra.mxu0 %v1820
        %1898 = vmatpush.bf16.msra.mxu0 %v1819
        %1899 = vmatpush.bf16.msra.mxu0 %v1818
        %1900 = vmatmul.bf16.gmra.mxu0 %v1134
        %v1901 = vpop.f32.mrf.mxu0
        %v1902 = vadd.f32 %v1889, %v1901
        %v1903 = vpop.f32.mrf.mxu0
        %1904 = vdwg.mxu0
        %1905 = vmatpush.bf16.msra.mxu0 %v1833
        %1906 = vmatpush.bf16.msra.mxu0 %v1832
        %1907 = vmatpush.bf16.msra.mxu0 %v1831
        %1908 = vmatpush.bf16.msra.mxu0 %v1830
        %1909 = vmatpush.bf16.msra.mxu0 %v1829
        %1910 = vmatpush.bf16.msra.mxu0 %v1828
        %1911 = vmatpush.bf16.msra.mxu0 %v1827
        %1912 = vmatpush.bf16.msra.mxu0 %v1826
        %1913 = vmatmul.bf16.gmra.mxu0 %v1135
        %v1914 = vpop.f32.mrf.mxu0
        %v1915 = vadd.f32 %v1902, %v1914
        %v1916 = vpop.f32.mrf.mxu0
        %1917 = vdwg.mxu0
        %v1918 = vld [vmem:[%s4 + $0x20] sm:$0xff]
        %v1919 = vld [vmem:[%s4 + $0x28] sm:$0xff]
        %v1920 = vld [vmem:[%s4 + $0x60] sm:$0xff]
        %v1921 = vld [vmem:[%s4 + $0x68] sm:$0xff]
        %v1922 = vld [vmem:[%s4 + $0xa0] sm:$0xff]
        %v1923 = vld [vmem:[%s4 + $0xa8] sm:$0xff]
        %v1924 = vld [vmem:[%s4 + $0xe0] sm:$0xff]
        %v1925 = vld [vmem:[%s4 + $0xe8] sm:$0xff]
        %v1926 = vld [vmem:[%s4 + $0x120] sm:$0xff]
        %v1927 = vld [vmem:[%s4 + $0x128] sm:$0xff]
        %v1928 = vld [vmem:[%s4 + $0x160] sm:$0xff]
        %v1929 = vld [vmem:[%s4 + $0x168] sm:$0xff]
        %v1930 = vld [vmem:[%s4 + $0x1a0] sm:$0xff]
        %v1931 = vld [vmem:[%s4 + $0x1a8] sm:$0xff]
        %v1932 = vld [vmem:[%s4 + $0x1e0] sm:$0xff]
        %v1933 = vld [vmem:[%s4 + $0x1e8] sm:$0xff]
        %v1934 = vld [vmem:[%s8 + $0x8] sm:$0xf]
        %v1936 = vperm.slane %v1934, 0
        %v1937 = vperm.slane %v1934, 1
        %v1938 = vperm.slane %v1934, 2
        %v1939 = vperm.slane %v1934, 3
        %v1960 = vunpack.c.l.b16 %v1918
        %v1961 = vunpack.c.h.b16 %v1918
        %v1962 = vunpack.c.l.b16 %v1919
        %v1963 = vunpack.c.h.b16 %v1919
        %v1964 = vunpack.c.l.b16 %v1920
        %v1965 = vunpack.c.h.b16 %v1920
        %v1966 = vunpack.c.l.b16 %v1921
        %v1967 = vunpack.c.h.b16 %v1921
        %v1968 = vunpack.c.l.b16 %v1922
        %v1969 = vunpack.c.h.b16 %v1922
        %v1970 = vunpack.c.l.b16 %v1923
        %v1971 = vunpack.c.h.b16 %v1923
        %v1972 = vunpack.c.l.b16 %v1924
        %v1973 = vunpack.c.h.b16 %v1924
        %v1974 = vunpack.c.l.b16 %v1925
        %v1975 = vunpack.c.h.b16 %v1925
        %v1976 = vunpack.c.l.b16 %v1926
        %v1977 = vunpack.c.h.b16 %v1926
        %v1978 = vunpack.c.l.b16 %v1927
        %v1979 = vunpack.c.h.b16 %v1927
        %v1980 = vunpack.c.l.b16 %v1928
        %v1981 = vunpack.c.h.b16 %v1928
        %v1982 = vunpack.c.l.b16 %v1929
        %v1983 = vunpack.c.h.b16 %v1929
        %v1984 = vunpack.c.l.b16 %v1930
        %v1985 = vunpack.c.h.b16 %v1930
        %v1986 = vunpack.c.l.b16 %v1931
        %v1987 = vunpack.c.h.b16 %v1931
        %v1988 = vunpack.c.l.b16 %v1932
        %v1989 = vunpack.c.h.b16 %v1932
        %v1990 = vunpack.c.l.b16 %v1933
        %v1991 = vunpack.c.h.b16 %v1933
        %v1992 = vpack.c.b16 %v1964, %v1960
        %v1993 = vpack.c.b16 %v1965, %v1961
        %v1994 = vpack.c.b16 %v1966, %v1962
        %v1995 = vpack.c.b16 %v1967, %v1963
        %v1996 = vpack.c.b16 %v1972, %v1968
        %v1997 = vpack.c.b16 %v1973, %v1969
        %v1998 = vpack.c.b16 %v1974, %v1970
        %v1999 = vpack.c.b16 %v1975, %v1971
        %v2000 = vpack.c.b16 %v1980, %v1976
        %v2001 = vpack.c.b16 %v1981, %v1977
        %v2002 = vpack.c.b16 %v1982, %v1978
        %v2003 = vpack.c.b16 %v1983, %v1979
        %v2004 = vpack.c.b16 %v1988, %v1984
        %v2005 = vpack.c.b16 %v1989, %v1985
        %v2006 = vpack.c.b16 %v1990, %v1986
        %v2007 = vpack.c.b16 %v1991, %v1987
        %2024 = vmatpush.bf16.msra.mxu0 0
        %2025 = vmatpush.bf16.msra.mxu0 0
        %2026 = vmatpush.bf16.msra.mxu0 0
        %2027 = vmatpush.bf16.msra.mxu0 0
        %2028 = vmatpush.bf16.msra.mxu0 %v2004
        %2029 = vmatpush.bf16.msra.mxu0 %v2000
        %2030 = vmatpush.bf16.msra.mxu0 %v1996
        %2031 = vmatpush.bf16.msra.mxu0 %v1992
        %2032 = vmatmul.bf16.gmra.mxu0 %v1074
        %v2033 = vpop.f32.mrf.mxu0
        %v2034 = vadd.f32 %v1936, %v2033
        %v2035 = vpop.f32.mrf.mxu0
        %2036 = vdwg.mxu0
        %2037 = vmatpush.bf16.msra.mxu0 0
        %2038 = vmatpush.bf16.msra.mxu0 0
        %2039 = vmatpush.bf16.msra.mxu0 0
        %2040 = vmatpush.bf16.msra.mxu0 0
        %2041 = vmatpush.bf16.msra.mxu0 %v2005
        %2042 = vmatpush.bf16.msra.mxu0 %v2001
        %2043 = vmatpush.bf16.msra.mxu0 %v1997
        %2044 = vmatpush.bf16.msra.mxu0 %v1993
        %2045 = vmatmul.bf16.gmra.mxu0 %v1074
        %v2046 = vpop.f32.mrf.mxu0
        %v2047 = vadd.f32 %v1937, %v2046
        %v2048 = vpop.f32.mrf.mxu0
        %2049 = vdwg.mxu0
        %2050 = vmatpush.bf16.msra.mxu0 0
        %2051 = vmatpush.bf16.msra.mxu0 0
        %2052 = vmatpush.bf16.msra.mxu0 0
        %2053 = vmatpush.bf16.msra.mxu0 0
        %2054 = vmatpush.bf16.msra.mxu0 %v2006
        %2055 = vmatpush.bf16.msra.mxu0 %v2002
        %2056 = vmatpush.bf16.msra.mxu0 %v1998
        %2057 = vmatpush.bf16.msra.mxu0 %v1994
        %2058 = vmatmul.bf16.gmra.mxu0 %v1074
        %v2059 = vpop.f32.mrf.mxu0
        %v2060 = vadd.f32 %v1938, %v2059
        %v2061 = vpop.f32.mrf.mxu0
        %2062 = vdwg.mxu0
        %2063 = vmatpush.bf16.msra.mxu0 0
        %2064 = vmatpush.bf16.msra.mxu0 0
        %2065 = vmatpush.bf16.msra.mxu0 0
        %2066 = vmatpush.bf16.msra.mxu0 0
        %2067 = vmatpush.bf16.msra.mxu0 %v2007
        %2068 = vmatpush.bf16.msra.mxu0 %v2003
        %2069 = vmatpush.bf16.msra.mxu0 %v1999
        %2070 = vmatpush.bf16.msra.mxu0 %v1995
        %2071 = vmatmul.bf16.gmra.mxu0 %v1074
        %v2072 = vpop.f32.mrf.mxu0
        %v2073 = vadd.f32 %v1939, %v2072
        %v2074 = vpop.f32.mrf.mxu0
        %2075 = vdwg.mxu0
        %v2076 = vmax.f32 %v2034, 0.0
        %v2077 = vmax.f32 %v2047, 0.0
        %v2078 = vmax.f32 %v2060, 0.0
        %v2079 = vmax.f32 %v2073, 0.0
        %v2080 = vpack.c.bf16 %v2076, %v2076
        %v2081 = vpack.c.bf16 %v2077, %v2077
        %v2082 = vpack.c.bf16 %v2078, %v2078
        %v2083 = vpack.c.bf16 %v2079, %v2079
        %v2084 = vld [vmem:[%s5 + $0x200] sm:$0xf]
        %v2085 = vld [vmem:[%s5 + $0x204] sm:$0xf]
        %v2086 = vld [vmem:[%s5 + $0x208] sm:$0xf]
        %v2087 = vld [vmem:[%s5 + $0x20c] sm:$0xf]
        %v2088 = vld [vmem:[%s5 + $0x210] sm:$0xf]
        %v2089 = vld [vmem:[%s5 + $0x214] sm:$0xf]
        %v2090 = vld [vmem:[%s5 + $0x218] sm:$0xf]
        %v2091 = vld [vmem:[%s5 + $0x21c] sm:$0xf]
        %v2092 = vld [vmem:[%s5 + $0x220] sm:$0xf]
        %v2093 = vld [vmem:[%s5 + $0x224] sm:$0xf]
        %v2094 = vld [vmem:[%s5 + $0x228] sm:$0xf]
        %v2095 = vld [vmem:[%s5 + $0x22c] sm:$0xf]
        %v2096 = vld [vmem:[%s5 + $0x230] sm:$0xf]
        %v2097 = vld [vmem:[%s5 + $0x234] sm:$0xf]
        %v2098 = vld [vmem:[%s5 + $0x238] sm:$0xf]
        %v2099 = vld [vmem:[%s5 + $0x23c] sm:$0xf]
        %v2100 = vld [vmem:[%s5 + $0x240] sm:$0xf]
        %v2101 = vld [vmem:[%s5 + $0x244] sm:$0xf]
        %v2102 = vld [vmem:[%s5 + $0x248] sm:$0xf]
        %v2103 = vld [vmem:[%s5 + $0x24c] sm:$0xf]
        %v2104 = vld [vmem:[%s5 + $0x250] sm:$0xf]
        %v2105 = vld [vmem:[%s5 + $0x254] sm:$0xf]
        %v2106 = vld [vmem:[%s5 + $0x258] sm:$0xf]
        %v2107 = vld [vmem:[%s5 + $0x25c] sm:$0xf]
        %v2108 = vld [vmem:[%s5 + $0x260] sm:$0xf]
        %v2109 = vld [vmem:[%s5 + $0x264] sm:$0xf]
        %v2110 = vld [vmem:[%s5 + $0x268] sm:$0xf]
        %v2111 = vld [vmem:[%s5 + $0x26c] sm:$0xf]
        %v2112 = vld [vmem:[%s5 + $0x270] sm:$0xf]
        %v2113 = vld [vmem:[%s5 + $0x274] sm:$0xf]
        %v2114 = vld [vmem:[%s5 + $0x278] sm:$0xf]
        %v2115 = vld [vmem:[%s5 + $0x27c] sm:$0xf]
        %v2116 = vld [vmem:[%s5 + $0x280] sm:$0xf]
        %v2117 = vld [vmem:[%s5 + $0x284] sm:$0xf]
        %v2118 = vld [vmem:[%s5 + $0x288] sm:$0xf]
        %v2119 = vld [vmem:[%s5 + $0x28c] sm:$0xf]
        %v2120 = vld [vmem:[%s5 + $0x290] sm:$0xf]
        %v2121 = vld [vmem:[%s5 + $0x294] sm:$0xf]
        %v2122 = vld [vmem:[%s5 + $0x298] sm:$0xf]
        %v2123 = vld [vmem:[%s5 + $0x29c] sm:$0xf]
        %v2124 = vld [vmem:[%s5 + $0x2a0] sm:$0xf]
        %v2125 = vld [vmem:[%s5 + $0x2a4] sm:$0xf]
        %v2126 = vld [vmem:[%s5 + $0x2a8] sm:$0xf]
        %v2127 = vld [vmem:[%s5 + $0x2ac] sm:$0xf]
        %v2128 = vld [vmem:[%s5 + $0x2b0] sm:$0xf]
        %v2129 = vld [vmem:[%s5 + $0x2b4] sm:$0xf]
        %v2130 = vld [vmem:[%s5 + $0x2b8] sm:$0xf]
        %v2131 = vld [vmem:[%s5 + $0x2bc] sm:$0xf]
        %v2132 = vld [vmem:[%s5 + $0x2c0] sm:$0xf]
        %v2133 = vld [vmem:[%s5 + $0x2c4] sm:$0xf]
        %v2134 = vld [vmem:[%s5 + $0x2c8] sm:$0xf]
        %v2135 = vld [vmem:[%s5 + $0x2cc] sm:$0xf]
        %v2136 = vld [vmem:[%s5 + $0x2d0] sm:$0xf]
        %v2137 = vld [vmem:[%s5 + $0x2d4] sm:$0xf]
        %v2138 = vld [vmem:[%s5 + $0x2d8] sm:$0xf]
        %v2139 = vld [vmem:[%s5 + $0x2dc] sm:$0xf]
        %v2140 = vld [vmem:[%s5 + $0x2e0] sm:$0xf]
        %v2141 = vld [vmem:[%s5 + $0x2e4] sm:$0xf]
        %v2142 = vld [vmem:[%s5 + $0x2e8] sm:$0xf]
        %v2143 = vld [vmem:[%s5 + $0x2ec] sm:$0xf]
        %v2144 = vld [vmem:[%s5 + $0x2f0] sm:$0xf]
        %v2145 = vld [vmem:[%s5 + $0x2f4] sm:$0xf]
        %v2146 = vld [vmem:[%s5 + $0x2f8] sm:$0xf]
        %v2147 = vld [vmem:[%s5 + $0x2fc] sm:$0xf]
        %v2212 = vunpack.c.l.b16 %v2084
        %v2213 = vunpack.c.l.b16 %v2085
        %v2214 = vunpack.c.l.b16 %v2086
        %v2215 = vunpack.c.l.b16 %v2087
        %v2216 = vunpack.c.l.b16 %v2088
        %v2217 = vunpack.c.l.b16 %v2089
        %v2218 = vunpack.c.l.b16 %v2090
        %v2219 = vunpack.c.l.b16 %v2091
        %v2220 = vunpack.c.l.b16 %v2092
        %v2221 = vunpack.c.l.b16 %v2093
        %v2222 = vunpack.c.l.b16 %v2094
        %v2223 = vunpack.c.l.b16 %v2095
        %v2224 = vunpack.c.l.b16 %v2096
        %v2225 = vunpack.c.l.b16 %v2097
        %v2226 = vunpack.c.l.b16 %v2098
        %v2227 = vunpack.c.l.b16 %v2099
        %v2228 = vunpack.c.l.b16 %v2100
        %v2229 = vunpack.c.l.b16 %v2101
        %v2230 = vunpack.c.l.b16 %v2102
        %v2231 = vunpack.c.l.b16 %v2103
        %v2232 = vunpack.c.l.b16 %v2104
        %v2233 = vunpack.c.l.b16 %v2105
        %v2234 = vunpack.c.l.b16 %v2106
        %v2235 = vunpack.c.l.b16 %v2107
        %v2236 = vunpack.c.l.b16 %v2108
        %v2237 = vunpack.c.l.b16 %v2109
        %v2238 = vunpack.c.l.b16 %v2110
        %v2239 = vunpack.c.l.b16 %v2111
        %v2240 = vunpack.c.l.b16 %v2112
        %v2241 = vunpack.c.l.b16 %v2113
        %v2242 = vunpack.c.l.b16 %v2114
        %v2243 = vunpack.c.l.b16 %v2115
        %v2244 = vunpack.c.l.b16 %v2116
        %v2245 = vunpack.c.l.b16 %v2117
        %v2246 = vunpack.c.l.b16 %v2118
        %v2247 = vunpack.c.l.b16 %v2119
        %v2248 = vunpack.c.l.b16 %v2120
        %v2249 = vunpack.c.l.b16 %v2121
        %v2250 = vunpack.c.l.b16 %v2122
        %v2251 = vunpack.c.l.b16 %v2123
        %v2252 = vunpack.c.l.b16 %v2124
        %v2253 = vunpack.c.l.b16 %v2125
        %v2254 = vunpack.c.l.b16 %v2126
        %v2255 = vunpack.c.l.b16 %v2127
        %v2256 = vunpack.c.l.b16 %v2128
        %v2257 = vunpack.c.l.b16 %v2129
        %v2258 = vunpack.c.l.b16 %v2130
        %v2259 = vunpack.c.l.b16 %v2131
        %v2260 = vunpack.c.l.b16 %v2132
        %v2261 = vunpack.c.l.b16 %v2133
        %v2262 = vunpack.c.l.b16 %v2134
        %v2263 = vunpack.c.l.b16 %v2135
        %v2264 = vunpack.c.l.b16 %v2136
        %v2265 = vunpack.c.l.b16 %v2137
        %v2266 = vunpack.c.l.b16 %v2138
        %v2267 = vunpack.c.l.b16 %v2139
        %v2268 = vunpack.c.l.b16 %v2140
        %v2269 = vunpack.c.l.b16 %v2141
        %v2270 = vunpack.c.l.b16 %v2142
        %v2271 = vunpack.c.l.b16 %v2143
        %v2272 = vunpack.c.l.b16 %v2144
        %v2273 = vunpack.c.l.b16 %v2145
        %v2274 = vunpack.c.l.b16 %v2146
        %v2275 = vunpack.c.l.b16 %v2147
        %v2276 = vpack.c.b16 %v2213, %v2212
        %v2277 = vpack.c.b16 %v2215, %v2214
        %v2278 = vpack.c.b16 %v2217, %v2216
        %v2279 = vpack.c.b16 %v2219, %v2218
        %v2280 = vpack.c.b16 %v2221, %v2220
        %v2281 = vpack.c.b16 %v2223, %v2222
        %v2282 = vpack.c.b16 %v2225, %v2224
        %v2283 = vpack.c.b16 %v2227, %v2226
        %v2284 = vpack.c.b16 %v2229, %v2228
        %v2285 = vpack.c.b16 %v2231, %v2230
        %v2286 = vpack.c.b16 %v2233, %v2232
        %v2287 = vpack.c.b16 %v2235, %v2234
        %v2288 = vpack.c.b16 %v2237, %v2236
        %v2289 = vpack.c.b16 %v2239, %v2238
        %v2290 = vpack.c.b16 %v2241, %v2240
        %v2291 = vpack.c.b16 %v2243, %v2242
        %v2292 = vpack.c.b16 %v2245, %v2244
        %v2293 = vpack.c.b16 %v2247, %v2246
        %v2294 = vpack.c.b16 %v2249, %v2248
        %v2295 = vpack.c.b16 %v2251, %v2250
        %v2296 = vpack.c.b16 %v2253, %v2252
        %v2297 = vpack.c.b16 %v2255, %v2254
        %v2298 = vpack.c.b16 %v2257, %v2256
        %v2299 = vpack.c.b16 %v2259, %v2258
        %v2300 = vpack.c.b16 %v2261, %v2260
        %v2301 = vpack.c.b16 %v2263, %v2262
        %v2302 = vpack.c.b16 %v2265, %v2264
        %v2303 = vpack.c.b16 %v2267, %v2266
        %v2304 = vpack.c.b16 %v2269, %v2268
        %v2305 = vpack.c.b16 %v2271, %v2270
        %v2306 = vpack.c.b16 %v2273, %v2272
        %v2307 = vpack.c.b16 %v2275, %v2274
        %2340 = vmatpush.bf16.msra.mxu0 %v2283
        %2341 = vmatpush.bf16.msra.mxu0 %v2282
        %2342 = vmatpush.bf16.msra.mxu0 %v2281
        %2343 = vmatpush.bf16.msra.mxu0 %v2280
        %2344 = vmatpush.bf16.msra.mxu0 %v2279
        %2345 = vmatpush.bf16.msra.mxu0 %v2278
        %2346 = vmatpush.bf16.msra.mxu0 %v2277
        %2347 = vmatpush.bf16.msra.mxu0 %v2276
        %2348 = vmatmul.bf16.gmra.mxu0 %v2080
        %v2349 = vpop.f32.mrf.mxu0
        %v2350 = vadd.f32 0.0, %v2349
        %v2351 = vpop.f32.mrf.mxu0
        %2352 = vdwg.mxu0
        %2353 = vmatpush.bf16.msra.mxu0 %v2291
        %2354 = vmatpush.bf16.msra.mxu0 %v2290
        %2355 = vmatpush.bf16.msra.mxu0 %v2289
        %2356 = vmatpush.bf16.msra.mxu0 %v2288
        %2357 = vmatpush.bf16.msra.mxu0 %v2287
        %2358 = vmatpush.bf16.msra.mxu0 %v2286
        %2359 = vmatpush.bf16.msra.mxu0 %v2285
        %2360 = vmatpush.bf16.msra.mxu0 %v2284
        %2361 = vmatmul.bf16.gmra.mxu0 %v2081
        %v2362 = vpop.f32.mrf.mxu0
        %v2363 = vadd.f32 %v2350, %v2362
        %v2364 = vpop.f32.mrf.mxu0
        %2365 = vdwg.mxu0
        %2366 = vmatpush.bf16.msra.mxu0 %v2299
        %2367 = vmatpush.bf16.msra.mxu0 %v2298
        %2368 = vmatpush.bf16.msra.mxu0 %v2297
        %2369 = vmatpush.bf16.msra.mxu0 %v2296
        %2370 = vmatpush.bf16.msra.mxu0 %v2295
        %2371 = vmatpush.bf16.msra.mxu0 %v2294
        %2372 = vmatpush.bf16.msra.mxu0 %v2293
        %2373 = vmatpush.bf16.msra.mxu0 %v2292
        %2374 = vmatmul.bf16.gmra.mxu0 %v2082
        %v2375 = vpop.f32.mrf.mxu0
        %v2376 = vadd.f32 %v2363, %v2375
        %v2377 = vpop.f32.mrf.mxu0
        %2378 = vdwg.mxu0
        %2379 = vmatpush.bf16.msra.mxu0 %v2307
        %2380 = vmatpush.bf16.msra.mxu0 %v2306
        %2381 = vmatpush.bf16.msra.mxu0 %v2305
        %2382 = vmatpush.bf16.msra.mxu0 %v2304
        %2383 = vmatpush.bf16.msra.mxu0 %v2303
        %2384 = vmatpush.bf16.msra.mxu0 %v2302
        %2385 = vmatpush.bf16.msra.mxu0 %v2301
        %2386 = vmatpush.bf16.msra.mxu0 %v2300
        %2387 = vmatmul.bf16.gmra.mxu0 %v2083
        %v2388 = vpop.f32.mrf.mxu0
        %v2389 = vadd.f32 %v2376, %v2388
        %v2390 = vpop.f32.mrf.mxu0
        %2391 = vdwg.mxu0
        %v2392 = vadd.f32 %v1915, %v2389
        %v2393 = vld [vmem:[%s4 + $0x30] sm:$0xff]
        %v2394 = vld [vmem:[%s4 + $0x38] sm:$0xff]
        %v2395 = vld [vmem:[%s4 + $0x70] sm:$0xff]
        %v2396 = vld [vmem:[%s4 + $0x78] sm:$0xff]
        %v2397 = vld [vmem:[%s4 + $0xb0] sm:$0xff]
        %v2398 = vld [vmem:[%s4 + $0xb8] sm:$0xff]
        %v2399 = vld [vmem:[%s4 + $0xf0] sm:$0xff]
        %v2400 = vld [vmem:[%s4 + $0xf8] sm:$0xff]
        %v2401 = vld [vmem:[%s4 + $0x130] sm:$0xff]
        %v2402 = vld [vmem:[%s4 + $0x138] sm:$0xff]
        %v2403 = vld [vmem:[%s4 + $0x170] sm:$0xff]
        %v2404 = vld [vmem:[%s4 + $0x178] sm:$0xff]
        %v2405 = vld [vmem:[%s4 + $0x1b0] sm:$0xff]
        %v2406 = vld [vmem:[%s4 + $0x1b8] sm:$0xff]
        %v2407 = vld [vmem:[%s4 + $0x1f0] sm:$0xff]
        %v2408 = vld [vmem:[%s4 + $0x1f8] sm:$0xff]
        %v2409 = vld [vmem:[%s8 + $0xc] sm:$0xf]
        %v2411 = vperm.slane %v2409, 0
        %v2412 = vperm.slane %v2409, 1
        %v2413 = vperm.slane %v2409, 2
        %v2414 = vperm.slane %v2409, 3
        %v2435 = vunpack.c.l.b16 %v2393
        %v2436 = vunpack.c.h.b16 %v2393
        %v2437 = vunpack.c.l.b16 %v2394
        %v2438 = vunpack.c.h.b16 %v2394
        %v2439 = vunpack.c.l.b16 %v2395
        %v2440 = vunpack.c.h.b16 %v2395
        %v2441 = vunpack.c.l.b16 %v2396
        %v2442 = vunpack.c.h.b16 %v2396
        %v2443 = vunpack.c.l.b16 %v2397
        %v2444 = vunpack.c.h.b16 %v2397
        %v2445 = vunpack.c.l.b16 %v2398
        %v2446 = vunpack.c.h.b16 %v2398
        %v2447 = vunpack.c.l.b16 %v2399
        %v2448 = vunpack.c.h.b16 %v2399
        %v2449 = vunpack.c.l.b16 %v2400
        %v2450 = vunpack.c.h.b16 %v2400
        %v2451 = vunpack.c.l.b16 %v2401
        %v2452 = vunpack.c.h.b16 %v2401
        %v2453 = vunpack.c.l.b16 %v2402
        %v2454 = vunpack.c.h.b16 %v2402
        %v2455 = vunpack.c.l.b16 %v2403
        %v2456 = vunpack.c.h.b16 %v2403
        %v2457 = vunpack.c.l.b16 %v2404
        %v2458 = vunpack.c.h.b16 %v2404
        %v2459 = vunpack.c.l.b16 %v2405
        %v2460 = vunpack.c.h.b16 %v2405
        %v2461 = vunpack.c.l.b16 %v2406
        %v2462 = vunpack.c.h.b16 %v2406
        %v2463 = vunpack.c.l.b16 %v2407
        %v2464 = vunpack.c.h.b16 %v2407
        %v2465 = vunpack.c.l.b16 %v2408
        %v2466 = vunpack.c.h.b16 %v2408
        %v2467 = vpack.c.b16 %v2439, %v2435
        %v2468 = vpack.c.b16 %v2440, %v2436
        %v2469 = vpack.c.b16 %v2441, %v2437
        %v2470 = vpack.c.b16 %v2442, %v2438
        %v2471 = vpack.c.b16 %v2447, %v2443
        %v2472 = vpack.c.b16 %v2448, %v2444
        %v2473 = vpack.c.b16 %v2449, %v2445
        %v2474 = vpack.c.b16 %v2450, %v2446
        %v2475 = vpack.c.b16 %v2455, %v2451
        %v2476 = vpack.c.b16 %v2456, %v2452
        %v2477 = vpack.c.b16 %v2457, %v2453
        %v2478 = vpack.c.b16 %v2458, %v2454
        %v2479 = vpack.c.b16 %v2463, %v2459
        %v2480 = vpack.c.b16 %v2464, %v2460
        %v2481 = vpack.c.b16 %v2465, %v2461
        %v2482 = vpack.c.b16 %v2466, %v2462
        %2499 = vmatpush.bf16.msra.mxu0 0
        %2500 = vmatpush.bf16.msra.mxu0 0
        %2501 = vmatpush.bf16.msra.mxu0 0
        %2502 = vmatpush.bf16.msra.mxu0 0
        %2503 = vmatpush.bf16.msra.mxu0 %v2479
        %2504 = vmatpush.bf16.msra.mxu0 %v2475
        %2505 = vmatpush.bf16.msra.mxu0 %v2471
        %2506 = vmatpush.bf16.msra.mxu0 %v2467
        %2507 = vmatmul.bf16.gmra.mxu0 %v1074
        %v2508 = vpop.f32.mrf.mxu0
        %v2509 = vadd.f32 %v2411, %v2508
        %v2510 = vpop.f32.mrf.mxu0
        %2511 = vdwg.mxu0
        %2512 = vmatpush.bf16.msra.mxu0 0
        %2513 = vmatpush.bf16.msra.mxu0 0
        %2514 = vmatpush.bf16.msra.mxu0 0
        %2515 = vmatpush.bf16.msra.mxu0 0
        %2516 = vmatpush.bf16.msra.mxu0 %v2480
        %2517 = vmatpush.bf16.msra.mxu0 %v2476
        %2518 = vmatpush.bf16.msra.mxu0 %v2472
        %2519 = vmatpush.bf16.msra.mxu0 %v2468
        %2520 = vmatmul.bf16.gmra.mxu0 %v1074
        %v2521 = vpop.f32.mrf.mxu0
        %v2522 = vadd.f32 %v2412, %v2521
        %v2523 = vpop.f32.mrf.mxu0
        %2524 = vdwg.mxu0
        %2525 = vmatpush.bf16.msra.mxu0 0
        %2526 = vmatpush.bf16.msra.mxu0 0
        %2527 = vmatpush.bf16.msra.mxu0 0
        %2528 = vmatpush.bf16.msra.mxu0 0
        %2529 = vmatpush.bf16.msra.mxu0 %v2481
        %2530 = vmatpush.bf16.msra.mxu0 %v2477
        %2531 = vmatpush.bf16.msra.mxu0 %v2473
        %2532 = vmatpush.bf16.msra.mxu0 %v2469
        %2533 = vmatmul.bf16.gmra.mxu0 %v1074
        %v2534 = vpop.f32.mrf.mxu0
        %v2535 = vadd.f32 %v2413, %v2534
        %v2536 = vpop.f32.mrf.mxu0
        %2537 = vdwg.mxu0
        %2538 = vmatpush.bf16.msra.mxu0 0
        %2539 = vmatpush.bf16.msra.mxu0 0
        %2540 = vmatpush.bf16.msra.mxu0 0
        %2541 = vmatpush.bf16.msra.mxu0 0
        %2542 = vmatpush.bf16.msra.mxu0 %v2482
        %2543 = vmatpush.bf16.msra.mxu0 %v2478
        %2544 = vmatpush.bf16.msra.mxu0 %v2474
        %2545 = vmatpush.bf16.msra.mxu0 %v2470
        %2546 = vmatmul.bf16.gmra.mxu0 %v1074
        %v2547 = vpop.f32.mrf.mxu0
        %v2548 = vadd.f32 %v2414, %v2547
        %v2549 = vpop.f32.mrf.mxu0
        %2550 = vdwg.mxu0
        %v2551 = vmax.f32 %v2509, 0.0
        %v2552 = vmax.f32 %v2522, 0.0
        %v2553 = vmax.f32 %v2535, 0.0
        %v2554 = vmax.f32 %v2548, 0.0
        %v2555 = vpack.c.bf16 %v2551, %v2551
        %v2556 = vpack.c.bf16 %v2552, %v2552
        %v2557 = vpack.c.bf16 %v2553, %v2553
        %v2558 = vpack.c.bf16 %v2554, %v2554
        %v2559 = vld [vmem:[%s5 + $0x300] sm:$0xf]
        %v2560 = vld [vmem:[%s5 + $0x304] sm:$0xf]
        %v2561 = vld [vmem:[%s5 + $0x308] sm:$0xf]
        %v2562 = vld [vmem:[%s5 + $0x30c] sm:$0xf]
        %v2563 = vld [vmem:[%s5 + $0x310] sm:$0xf]
        %v2564 = vld [vmem:[%s5 + $0x314] sm:$0xf]
        %v2565 = vld [vmem:[%s5 + $0x318] sm:$0xf]
        %v2566 = vld [vmem:[%s5 + $0x31c] sm:$0xf]
        %v2567 = vld [vmem:[%s5 + $0x320] sm:$0xf]
        %v2568 = vld [vmem:[%s5 + $0x324] sm:$0xf]
        %v2569 = vld [vmem:[%s5 + $0x328] sm:$0xf]
        %v2570 = vld [vmem:[%s5 + $0x32c] sm:$0xf]
        %v2571 = vld [vmem:[%s5 + $0x330] sm:$0xf]
        %v2572 = vld [vmem:[%s5 + $0x334] sm:$0xf]
        %v2573 = vld [vmem:[%s5 + $0x338] sm:$0xf]
        %v2574 = vld [vmem:[%s5 + $0x33c] sm:$0xf]
        %v2575 = vld [vmem:[%s5 + $0x340] sm:$0xf]
        %v2576 = vld [vmem:[%s5 + $0x344] sm:$0xf]
        %v2577 = vld [vmem:[%s5 + $0x348] sm:$0xf]
        %v2578 = vld [vmem:[%s5 + $0x34c] sm:$0xf]
        %v2579 = vld [vmem:[%s5 + $0x350] sm:$0xf]
        %v2580 = vld [vmem:[%s5 + $0x354] sm:$0xf]
        %v2581 = vld [vmem:[%s5 + $0x358] sm:$0xf]
        %v2582 = vld [vmem:[%s5 + $0x35c] sm:$0xf]
        %v2583 = vld [vmem:[%s5 + $0x360] sm:$0xf]
        %v2584 = vld [vmem:[%s5 + $0x364] sm:$0xf]
        %v2585 = vld [vmem:[%s5 + $0x368] sm:$0xf]
        %v2586 = vld [vmem:[%s5 + $0x36c] sm:$0xf]
        %v2587 = vld [vmem:[%s5 + $0x370] sm:$0xf]
        %v2588 = vld [vmem:[%s5 + $0x374] sm:$0xf]
        %v2589 = vld [vmem:[%s5 + $0x378] sm:$0xf]
        %v2590 = vld [vmem:[%s5 + $0x37c] sm:$0xf]
        %v2591 = vld [vmem:[%s5 + $0x380] sm:$0xf]
        %v2592 = vld [vmem:[%s5 + $0x384] sm:$0xf]
        %v2593 = vld [vmem:[%s5 + $0x388] sm:$0xf]
        %v2594 = vld [vmem:[%s5 + $0x38c] sm:$0xf]
        %v2595 = vld [vmem:[%s5 + $0x390] sm:$0xf]
        %v2596 = vld [vmem:[%s5 + $0x394] sm:$0xf]
        %v2597 = vld [vmem:[%s5 + $0x398] sm:$0xf]
        %v2598 = vld [vmem:[%s5 + $0x39c] sm:$0xf]
        %v2599 = vld [vmem:[%s5 + $0x3a0] sm:$0xf]
        %v2600 = vld [vmem:[%s5 + $0x3a4] sm:$0xf]
        %v2601 = vld [vmem:[%s5 + $0x3a8] sm:$0xf]
        %v2602 = vld [vmem:[%s5 + $0x3ac] sm:$0xf]
        %v2603 = vld [vmem:[%s5 + $0x3b0] sm:$0xf]
        %v2604 = vld [vmem:[%s5 + $0x3b4] sm:$0xf]
        %v2605 = vld [vmem:[%s5 + $0x3b8] sm:$0xf]
        %v2606 = vld [vmem:[%s5 + $0x3bc] sm:$0xf]
        %v2607 = vld [vmem:[%s5 + $0x3c0] sm:$0xf]
        %v2608 = vld [vmem:[%s5 + $0x3c4] sm:$0xf]
        %v2609 = vld [vmem:[%s5 + $0x3c8] sm:$0xf]
        %v2610 = vld [vmem:[%s5 + $0x3cc] sm:$0xf]
        %v2611 = vld [vmem:[%s5 + $0x3d0] sm:$0xf]
        %v2612 = vld [vmem:[%s5 + $0x3d4] sm:$0xf]
        %v2613 = vld [vmem:[%s5 + $0x3d8] sm:$0xf]
        %v2614 = vld [vmem:[%s5 + $0x3dc] sm:$0xf]
        %v2615 = vld [vmem:[%s5 + $0x3e0] sm:$0xf]
        %v2616 = vld [vmem:[%s5 + $0x3e4] sm:$0xf]
        %v2617 = vld [vmem:[%s5 + $0x3e8] sm:$0xf]
        %v2618 = vld [vmem:[%s5 + $0x3ec] sm:$0xf]
        %v2619 = vld [vmem:[%s5 + $0x3f0] sm:$0xf]
        %v2620 = vld [vmem:[%s5 + $0x3f4] sm:$0xf]
        %v2621 = vld [vmem:[%s5 + $0x3f8] sm:$0xf]
        %v2622 = vld [vmem:[%s5 + $0x3fc] sm:$0xf]
        %v2687 = vunpack.c.l.b16 %v2559
        %v2688 = vunpack.c.l.b16 %v2560
        %v2689 = vunpack.c.l.b16 %v2561
        %v2690 = vunpack.c.l.b16 %v2562
        %v2691 = vunpack.c.l.b16 %v2563
        %v2692 = vunpack.c.l.b16 %v2564
        %v2693 = vunpack.c.l.b16 %v2565
        %v2694 = vunpack.c.l.b16 %v2566
        %v2695 = vunpack.c.l.b16 %v2567
        %v2696 = vunpack.c.l.b16 %v2568
        %v2697 = vunpack.c.l.b16 %v2569
        %v2698 = vunpack.c.l.b16 %v2570
        %v2699 = vunpack.c.l.b16 %v2571
        %v2700 = vunpack.c.l.b16 %v2572
        %v2701 = vunpack.c.l.b16 %v2573
        %v2702 = vunpack.c.l.b16 %v2574
        %v2703 = vunpack.c.l.b16 %v2575
        %v2704 = vunpack.c.l.b16 %v2576
        %v2705 = vunpack.c.l.b16 %v2577
        %v2706 = vunpack.c.l.b16 %v2578
        %v2707 = vunpack.c.l.b16 %v2579
        %v2708 = vunpack.c.l.b16 %v2580
        %v2709 = vunpack.c.l.b16 %v2581
        %v2710 = vunpack.c.l.b16 %v2582
        %v2711 = vunpack.c.l.b16 %v2583
        %v2712 = vunpack.c.l.b16 %v2584
        %v2713 = vunpack.c.l.b16 %v2585
        %v2714 = vunpack.c.l.b16 %v2586
        %v2715 = vunpack.c.l.b16 %v2587
        %v2716 = vunpack.c.l.b16 %v2588
        %v2717 = vunpack.c.l.b16 %v2589
        %v2718 = vunpack.c.l.b16 %v2590
        %v2719 = vunpack.c.l.b16 %v2591
        %v2720 = vunpack.c.l.b16 %v2592
        %v2721 = vunpack.c.l.b16 %v2593
        %v2722 = vunpack.c.l.b16 %v2594
        %v2723 = vunpack.c.l.b16 %v2595
        %v2724 = vunpack.c.l.b16 %v2596
        %v2725 = vunpack.c.l.b16 %v2597
        %v2726 = vunpack.c.l.b16 %v2598
        %v2727 = vunpack.c.l.b16 %v2599
        %v2728 = vunpack.c.l.b16 %v2600
        %v2729 = vunpack.c.l.b16 %v2601
        %v2730 = vunpack.c.l.b16 %v2602
        %v2731 = vunpack.c.l.b16 %v2603
        %v2732 = vunpack.c.l.b16 %v2604
        %v2733 = vunpack.c.l.b16 %v2605
        %v2734 = vunpack.c.l.b16 %v2606
        %v2735 = vunpack.c.l.b16 %v2607
        %v2736 = vunpack.c.l.b16 %v2608
        %v2737 = vunpack.c.l.b16 %v2609
        %v2738 = vunpack.c.l.b16 %v2610
        %v2739 = vunpack.c.l.b16 %v2611
        %v2740 = vunpack.c.l.b16 %v2612
        %v2741 = vunpack.c.l.b16 %v2613
        %v2742 = vunpack.c.l.b16 %v2614
        %v2743 = vunpack.c.l.b16 %v2615
        %v2744 = vunpack.c.l.b16 %v2616
        %v2745 = vunpack.c.l.b16 %v2617
        %v2746 = vunpack.c.l.b16 %v2618
        %v2747 = vunpack.c.l.b16 %v2619
        %v2748 = vunpack.c.l.b16 %v2620
        %v2749 = vunpack.c.l.b16 %v2621
        %v2750 = vunpack.c.l.b16 %v2622
        %v2751 = vpack.c.b16 %v2688, %v2687
        %v2752 = vpack.c.b16 %v2690, %v2689
        %v2753 = vpack.c.b16 %v2692, %v2691
        %v2754 = vpack.c.b16 %v2694, %v2693
        %v2755 = vpack.c.b16 %v2696, %v2695
        %v2756 = vpack.c.b16 %v2698, %v2697
        %v2757 = vpack.c.b16 %v2700, %v2699
        %v2758 = vpack.c.b16 %v2702, %v2701
        %v2759 = vpack.c.b16 %v2704, %v2703
        %v2760 = vpack.c.b16 %v2706, %v2705
        %v2761 = vpack.c.b16 %v2708, %v2707
        %v2762 = vpack.c.b16 %v2710, %v2709
        %v2763 = vpack.c.b16 %v2712, %v2711
        %v2764 = vpack.c.b16 %v2714, %v2713
        %v2765 = vpack.c.b16 %v2716, %v2715
        %v2766 = vpack.c.b16 %v2718, %v2717
        %v2767 = vpack.c.b16 %v2720, %v2719
        %v2768 = vpack.c.b16 %v2722, %v2721
        %v2769 = vpack.c.b16 %v2724, %v2723
        %v2770 = vpack.c.b16 %v2726, %v2725
        %v2771 = vpack.c.b16 %v2728, %v2727
        %v2772 = vpack.c.b16 %v2730, %v2729
        %v2773 = vpack.c.b16 %v2732, %v2731
        %v2774 = vpack.c.b16 %v2734, %v2733
        %v2775 = vpack.c.b16 %v2736, %v2735
        %v2776 = vpack.c.b16 %v2738, %v2737
        %v2777 = vpack.c.b16 %v2740, %v2739
        %v2778 = vpack.c.b16 %v2742, %v2741
        %v2779 = vpack.c.b16 %v2744, %v2743
        %v2780 = vpack.c.b16 %v2746, %v2745
        %v2781 = vpack.c.b16 %v2748, %v2747
        %v2782 = vpack.c.b16 %v2750, %v2749
        %2815 = vmatpush.bf16.msra.mxu0 %v2758
        %2816 = vmatpush.bf16.msra.mxu0 %v2757
        %2817 = vmatpush.bf16.msra.mxu0 %v2756
        %2818 = vmatpush.bf16.msra.mxu0 %v2755
        %2819 = vmatpush.bf16.msra.mxu0 %v2754
        %2820 = vmatpush.bf16.msra.mxu0 %v2753
        %2821 = vmatpush.bf16.msra.mxu0 %v2752
        %2822 = vmatpush.bf16.msra.mxu0 %v2751
        %2823 = vmatmul.bf16.gmra.mxu0 %v2555
        %v2824 = vpop.f32.mrf.mxu0
        %v2825 = vadd.f32 0.0, %v2824
        %v2826 = vpop.f32.mrf.mxu0
        %2827 = vdwg.mxu0
        %2828 = vmatpush.bf16.msra.mxu0 %v2766
        %2829 = vmatpush.bf16.msra.mxu0 %v2765
        %2830 = vmatpush.bf16.msra.mxu0 %v2764
        %2831 = vmatpush.bf16.msra.mxu0 %v2763
        %2832 = vmatpush.bf16.msra.mxu0 %v2762
        %2833 = vmatpush.bf16.msra.mxu0 %v2761
        %2834 = vmatpush.bf16.msra.mxu0 %v2760
        %2835 = vmatpush.bf16.msra.mxu0 %v2759
        %2836 = vmatmul.bf16.gmra.mxu0 %v2556
        %v2837 = vpop.f32.mrf.mxu0
        %v2838 = vadd.f32 %v2825, %v2837
        %v2839 = vpop.f32.mrf.mxu0
        %2840 = vdwg.mxu0
        %2841 = vmatpush.bf16.msra.mxu0 %v2774
        %2842 = vmatpush.bf16.msra.mxu0 %v2773
        %2843 = vmatpush.bf16.msra.mxu0 %v2772
        %2844 = vmatpush.bf16.msra.mxu0 %v2771
        %2845 = vmatpush.bf16.msra.mxu0 %v2770
        %2846 = vmatpush.bf16.msra.mxu0 %v2769
        %2847 = vmatpush.bf16.msra.mxu0 %v2768
        %2848 = vmatpush.bf16.msra.mxu0 %v2767
        %2849 = vmatmul.bf16.gmra.mxu0 %v2557
        %v2850 = vpop.f32.mrf.mxu0
        %v2851 = vadd.f32 %v2838, %v2850
        %v2852 = vpop.f32.mrf.mxu0
        %2853 = vdwg.mxu0
        %2854 = vmatpush.bf16.msra.mxu0 %v2782
        %2855 = vmatpush.bf16.msra.mxu0 %v2781
        %2856 = vmatpush.bf16.msra.mxu0 %v2780
        %2857 = vmatpush.bf16.msra.mxu0 %v2779
        %2858 = vmatpush.bf16.msra.mxu0 %v2778
        %2859 = vmatpush.bf16.msra.mxu0 %v2777
        %2860 = vmatpush.bf16.msra.mxu0 %v2776
        %2861 = vmatpush.bf16.msra.mxu0 %v2775
        %2862 = vmatmul.bf16.gmra.mxu0 %v2558
        %v2863 = vpop.f32.mrf.mxu0
        %v2864 = vadd.f32 %v2851, %v2863
        %v2865 = vpop.f32.mrf.mxu0
        %2866 = vdwg.mxu0
        %v2867 = vadd.f32 %v2392, %v2864
        %v2868 = vperm.slane %v335, 0
        %v2869 = vadd.f32 %v2867, %v2868
        %v2870 = vadd.f32 %v965, %v2869
        %v2871 = vsel %vm729, %v2870, 0.0
        %2872 = vadd.xlane.f32.xlu0 %v2871
        %v2873 = vpop.xlane.xlu0 %2872
        %v2874 = vmul.f32 %v2873, %v942
        %v2875 = vsub.f32 %v2870, %v2874
        %v2876 = vmul.f32 %v2875, %v2875
        %v2877 = vsel %vm729, %v2876, 0.0
        %2878 = vadd.xlane.f32.xlu0 %v2877
        %v2879 = vpop.xlane.xlu0 %2878
        %v2880 = vmul.f32 %v2879, %v942
        %v2881 = vadd.f32 %v2880, 1e-05
        %v2882 = vrsqrt.pop %v2881
        %v2883 = vmul.f32 %v2882, %v2881
        %v2884 = vmul.f32 %v2883, %v2882
        %v2885 = vmul.f32 0.5, %v2884
        %v2886 = vsub.f32 1.5, %v2885
        %v2887 = vmul.f32 %v2882, %v2886
        %vm2888 = vweird.f32 %v2881
        %vm2889 = vweird.f32 %v2882
        %vm2890 = vmor %vm2888, %vm2889
        %v2891 = vsel %vm2890, %v2882, %v2887
        %v2892 = vmul.f32 %v2875, %v2891
        %v2893 = vperm.slane %v336, 0
        %v2894 = vmul.f32 %v2892, %v2893
        %v2895 = vperm.slane %v337, 0
        %v2896 = vadd.f32 %v2894, %v2895
        %v2897 = vmul.u32 %v371, 8
        %vm2898 = vcmp.ge.s32.totalorder %v373, %v2897
        %v2899 = vadd.s32 %v371, 1
        %v2900 = vmul.u32 %v2899, 8
        %vm2901 = vcmp.lt.s32.totalorder %v373, %v2900
        %vm2902 = vmand %vm2898, %vm2901
        %v2903 = vsel %vm2902, 0.125, 0.0
        %v2905 = vsel %vm377, %v2903, 0
        %2907 = vmatpush.msra.mxu0 0.0
        %2908 = vmatpush.msra.mxu0 0.0
        %2909 = vmatpush.msra.mxu0 0.0
        %2910 = vmatpush.msra.mxu0 0.0
        %2911 = vmatpush.msra.mxu0 0.0
        %2912 = vmatpush.msra.mxu0 0.0
        %2913 = vmatpush.msra.mxu0 0.0
        %2914 = vmatpush.msra.mxu0 0.0
        %2915 = vmatpush.msra.mxu0 0.0
        %2916 = vmatpush.msra.mxu0 0.0
        %2917 = vmatpush.msra.mxu0 0.0
        %2918 = vmatpush.msra.mxu0 0.0
        %2919 = vmatpush.msra.mxu0 0.0
        %2920 = vmatpush.msra.mxu0 0.0
        %2921 = vmatpush.msra.mxu0 0.0
        %2922 = vmatpush.msra.mxu0 %v2896
        %2923 = vmatmul.f32.gmra.mxu0 %v2905
        %v2924 = vpop.f32.mrf.mxu0
        %v2925 = vadd.f32 0.0, %v2924
        %2926 = vdwg.mxu0
        %vm2927 = vcmask 516096
        %2928 = vst.msk [vmem:[%s324] sm:$0x1] %vm2927, %v2925
        %s2929 = sand.u32 %s225, 1
        %s2930 = scalar_lea.sflag [#allocation3], %s2929
        %s2931 = sand.u32 %s225, 1
        %s2932 = scalar_lea.vmem [#allocation2], %s2931
        // Predicated region
        $region57: #{tpu_custom_call.1} parent=55 // pred_check
          %p2933 = pneg %p235
        $region58: #{tpu_custom_call.1} parent=55 // pred_check_branch
          %2935 = sbr.rel (%p2933) target = $region60
        $region59: #{tpu_custom_call.1} parent=55 // pred_region
          %2937 = vsyncadd %s2930, 0
          %s2938 = scalar_lea.hbm %s9, %s23
          %s2940 = sshll.u32 %s2932, 4
          %s2941 = int_to_ptr.vmem [resolvable:$true] %s2940
          %s2942 = sshll.u32 %s2938, 4
          %s2943 = int_to_ptr.hbm [resolvable:$true] %s2942
          %2945 = dma.vmem_to_hbm [thread:$0]  %s2941, 16, %s2943, %s2930
        $region60: #{tpu_custom_call.1} parent=55 // pred_fallthru
          _
      $region56: #{tpu_custom_call.1} parent=5 // pred_fallthru
        _
      %p2946 = scmp.le.s32.totalorder 2, %s18
      // Predicated region
      $region61: #{tpu_custom_call.1} parent=5 // pred_check
        %p2947 = pneg %p2946
      $region62: #{tpu_custom_call.1} parent=5 // pred_check_branch
        %2949 = sbr.rel (%p2947) target = $region64
      $region63: #{tpu_custom_call.1} parent=5 // pred_region
        %s2950 = ssub.s32 %s18, 2
        // Predicated region
        $region65: #{tpu_custom_call.1} parent=63 // pred_check
          %p2951 = pneg %p241
        $region66: #{tpu_custom_call.1} parent=63 // pred_check_branch
          %2953 = sbr.rel (%p2951) target = $region68
        $region67: #{tpu_custom_call.1} parent=63 // pred_region
          %s2954 = sand.u32 %s226, 1
          %s2955 = scalar_lea.sflag [#allocation3], %s2954
          %s2956 = sand.u32 %s226, 1
          %s2957 = scalar_lea.vmem [#allocation2], %s2956
          %2959 = dma.done %s2955, 16
        $region68: #{tpu_custom_call.1} parent=63 // pred_fallthru
          _
      $region64: #{tpu_custom_call.1} parent=5 // pred_fallthru
        _
    $region6: #{tpu_custom_call.1} parent=1 // loop_footer
      %s22 = sadd.s32 1, %s18
    $region7: #{tpu_custom_call.1} parent=1 // loop_footer_branch
      %17 = sbr.rel target = $region3
    $region8: #{tpu_custom_call.1} parent=1 // loop_exit
      _
    %2960 = vsyncpa [#allocation3], 1
    %s2961 = scalar_lea.sflag [#allocation3], 1
    %2962 = vsyncpa %s2961, 1

</llo_original>
